<compile_context>
chip_gen: v6e
topology: v6e:2x2x1
jax: 0.10.0
libtpu: 0.0.40
codegen_flags: <defaults>
</compile_context>

<pallas_src>
import functools

import jax
import jax.numpy as jnp
import numpy as np
from jax.experimental import pallas as pl
from jax.experimental.pallas import tpu as pltpu


def _mic_attention_kernel(
    q_ref, k_ref, v_ref,          # (BB, S, D) blocks
    wq_ref, wk_ref, wv_ref,       # (D, H*Dk) / (D, H*Dk) / (D, H*Dv)
    wfc_ref,                      # (H*Dv, D)
    gamma_ref, beta_ref,          # (1, D)
    out_ref,                      # (BB, S, D)
    *, n_heads, d_key, d_value, eps,
):
    BB, S, D = q_ref.shape
    R = BB * S
    f32 = jnp.float32
    bf16 = jnp.bfloat16

    # Flatten batch*seq onto the sublane axis for the dense projections / LN.
    q2 = q_ref[...].reshape(R, D)
    k2 = k_ref[...].reshape(R, D)
    v2 = v_ref[...].reshape(R, D)

    scale = 1.0 / (float(d_key) ** 0.5)

    # --- Q / K / V projections: one wide MXU matmul each ---------------------
    # bf16 operands, f32 accumulation; 1/sqrt(d_key) folded into Q.
    Q = jnp.dot(q2.astype(bf16), wq_ref[...].astype(bf16),
                preferred_element_type=f32) * scale            # (R, H*Dk)
    K = jnp.dot(k2.astype(bf16), wk_ref[...].astype(bf16),
                preferred_element_type=f32)                    # (R, H*Dk)
    V = jnp.dot(v2.astype(bf16), wv_ref[...].astype(bf16),
                preferred_element_type=f32)                    # (R, H*Dv)

    Qb = Q.astype(bf16).reshape(BB, S, n_heads * d_key)
    Kb = K.astype(bf16).reshape(BB, S, n_heads * d_key)
    Vb = V.astype(bf16).reshape(BB, S, n_heads * d_value)

    wfc_bf = wfc_ref[...].astype(bf16)                         # (H*Dv, D)

    # --- per-head attention with the fc projection folded in -----------------
    acc = jnp.zeros((R, D), f32)
    for h in range(n_heads):                                   # unrolled at trace time
        qh = Qb[:, :, h * d_key:(h + 1) * d_key]               # (BB, S, Dk) bf16
        kh = Kb[:, :, h * d_key:(h + 1) * d_key]               # (BB, S, Dk)
        vh = Vb[:, :, h * d_value:(h + 1) * d_value]           # (BB, S, Dv)

        # scores: contract last dims of Q and K directly (no explicit K.T).
        s = jax.lax.dot_general(
            qh, kh, (((2,), (2,)), ((0,), (0,))),
            preferred_element_type=f32)                        # (BB, S, S) f32

        # numerically-stable softmax over keys; EUP reciprocal for the denom.
        s = s - jnp.max(s, axis=-1, keepdims=True)
        p = jnp.exp(s)
        p = p * pl.reciprocal(jnp.sum(p, axis=-1, keepdims=True), approx=True)

        ho = jax.lax.dot_general(
            p.astype(bf16), vh, (((2,), (1,)), ((0,), (0,))),
            preferred_element_type=f32)                        # (BB, S, Dv) f32

        # Fold the fc projection per head (sublane slice of wfc) -- replaces
        # the lane-axis concat + one big (S, H*Dv) x (H*Dv, D) matmul.
        wfc_h = wfc_bf[h * d_value:(h + 1) * d_value, :]       # (Dv, D)
        acc = acc + jnp.dot(ho.astype(bf16).reshape(R, d_value), wfc_h,
                            preferred_element_type=f32)        # (R, D)

    # --- residual + LayerNorm(eps=1e-6), f32 elementwise ----------------------
    x = q2 + acc
    mean = jnp.mean(x, axis=-1, keepdims=True)
    xc = x - mean
    var = jnp.mean(xc * xc, axis=-1, keepdims=True)
    normed = xc * jax.lax.rsqrt(var + eps)
    out = normed * gamma_ref[...] + beta_ref[...]              # (1, D) broadcasts

    out_ref[...] = out.reshape(BB, S, D).astype(out_ref.dtype)


def mic_pearson_attention(query, key, value, params, *, seq_length, d_model,
                          n_heads, d_key, d_value, batch_block=None):
    B, S, D = query.shape
    assert S == seq_length and D == d_model
    assert n_heads * d_value == d_model, "view() in torch forward requires H*Dv == d_model"

    wq, wk, wv, wfc, gamma, beta = params
    gamma2 = gamma.reshape(1, d_model)
    beta2 = beta.reshape(1, d_model)

    # Whole batch in one block for small problems (grid collapses to (1,)),
    # amortizing per-step overhead; larger B can tile over the batch axis.
    if batch_block is None:
        batch_block = B
    assert B % batch_block == 0
    grid = (B // batch_block,)

    kernel = functools.partial(
        _mic_attention_kernel,
        n_heads=n_heads, d_key=d_key, d_value=d_value, eps=1e-6,
    )

    def replicated(shape):
        n = len(shape)
        return pl.BlockSpec(shape, lambda b, _n=n: (0,) * _n)

    per_block = pl.BlockSpec((batch_block, S, D), lambda b: (b, 0, 0))

    return pl.pallas_call(
        kernel,
        out_shape=jax.ShapeDtypeStruct((B, S, D), query.dtype),
        grid_spec=pltpu.PrefetchScalarGridSpec(
            num_scalar_prefetch=0,
            grid=grid,
            in_specs=[
                per_block, per_block, per_block,               # q, k, v
                replicated(wq.shape), replicated(wk.shape), replicated(wv.shape),
                replicated(wfc.shape),
                replicated(gamma2.shape), replicated(beta2.shape),
            ],
            out_specs=pl.BlockSpec((batch_block, S, D), lambda b: (b, 0, 0)),
        ),
        compiler_params=pltpu.CompilerParams(
            dimension_semantics=("parallel",),
            vmem_limit_bytes=32 * 1024 * 1024),
    )(query, key, value, wq, wk, wv, wfc, gamma2, beta2)


def _reference(query, key, value, params, *, n_heads, d_key, d_value):
    """Pure-JAX f32 reference mirroring the PyTorch forward (eval mode)."""
    wq, wk, wv, wfc, gamma, beta = params
    B, S, D = query.shape
    Q = (query @ wq).reshape(B, S, n_heads, d_key).transpose(0, 2, 1, 3)
    K = (key @ wk).reshape(B, S, n_heads, d_key).transpose(0, 2, 1, 3)
    V = (value @ wv).reshape(B, S, n_heads, d_value).transpose(0, 2, 1, 3)
    scores = jnp.einsum("bhqd,bhkd->bhqk", Q, K) / (d_key ** 0.5)
    attn = jax.nn.softmax(scores, axis=-1)
    out = jnp.einsum("bhqk,bhkd->bhqd", attn, V)
    out = out.transpose(0, 2, 1, 3).reshape(B, S, D)
    out = out @ wfc
    x = query + out
    mean = jnp.mean(x, axis=-1, keepdims=True)
    var = jnp.mean((x - mean) ** 2, axis=-1, keepdims=True)
    return ((x - mean) / jnp.sqrt(var + 1e-6)) * gamma + beta


if __name__ == "__main__":
    # Small shapes consistent with the module's forward:
    #   d_model = n_heads * d_value (required by the .view() in the torch code)
    B, S = 2, 8
    n_heads, d_key, d_value = 4, 8, 8
    d_model = n_heads * d_value  # 32

    key0 = jax.random.PRNGKey(0)
    k_q, k_k, k_v, k_wq, k_wk, k_wv, k_fc = jax.random.split(key0, 7)

    # Deterministic parameter init (stored as (in, out) for x @ W).
    scale = 0.05
    wq = scale * jax.random.normal(k_wq, (d_model, n_heads * d_key), jnp.float32)
    wk = scale * jax.random.normal(k_wk, (d_model, n_heads * d_key), jnp.float32)
    wv = scale * jax.random.normal(k_wv, (d_model, n_heads * d_value), jnp.float32)
    wfc = scale * jax.random.normal(k_fc, (n_heads * d_value, d_model), jnp.float32)
    gamma = jnp.ones((d_model,), jnp.float32)
    beta = jnp.zeros((d_model,), jnp.float32)
    params = (wq, wk, wv, wfc, gamma, beta)

    query = jax.random.normal(k_q, (B, S, d_model), jnp.float32)
    key_in = jax.random.normal(k_k, (B, S, d_model), jnp.float32)
    value = jax.random.normal(k_v, (B, S, d_model), jnp.float32)

    out = mic_pearson_attention(
        query, key_in, value, params,
        seq_length=S, d_model=d_model,
        n_heads=n_heads, d_key=d_key, d_value=d_value,
    )
    out = jax.block_until_ready(out)

    ref = _reference(query, key_in, value, params,
                     n_heads=n_heads, d_key=d_key, d_value=d_value)
    # Tolerance covers bf16 MXU operands (f32 accumulation) + approx EUP
    # reciprocal in the kernel; observed error is ~1e-3 at these shapes.
    np.testing.assert_allclose(np.asarray(out), np.asarray(ref),
                               atol=2e-2, rtol=2e-2)

    print("KERNEL_OK")
</pallas_src>

<mosaic_0001>
module attributes {stable_mosaic.version = 11 : i64} {
  func.func @_mic_attention_kernel(%arg0: i32, %arg1: memref<2x8x32xf32, #tpu.memory_space<vmem>>, %arg2: memref<2x8x32xf32, #tpu.memory_space<vmem>>, %arg3: memref<2x8x32xf32, #tpu.memory_space<vmem>>, %arg4: memref<32x32xf32, #tpu.memory_space<vmem>>, %arg5: memref<32x32xf32, #tpu.memory_space<vmem>>, %arg6: memref<32x32xf32, #tpu.memory_space<vmem>>, %arg7: memref<32x32xf32, #tpu.memory_space<vmem>>, %arg8: memref<1x32xf32, #tpu.memory_space<vmem>>, %arg9: memref<1x32xf32, #tpu.memory_space<vmem>>, %arg10: memref<2x8x32xf32, #tpu.memory_space<vmem>>) attributes {dimension_semantics = [#tpu.dimension_semantics<parallel>], iteration_bounds = array<i64: 1>, scalar_prefetch = 0 : i64, scratch_operands = 0 : i64, tpu.core_type = #tpu.core_type<tc>, window_params = [{transform_indices = @transform_0, window_bounds = array<i64: 2, 8, 32>}, {transform_indices = @transform_1, window_bounds = array<i64: 2, 8, 32>}, {transform_indices = @transform_2, window_bounds = array<i64: 2, 8, 32>}, {pipeline_mode = #tpu.pipeline_mode<synchronous>, transform_indices = @transform_3, window_bounds = array<i64: 32, 32>}, {pipeline_mode = #tpu.pipeline_mode<synchronous>, transform_indices = @transform_4, window_bounds = array<i64: 32, 32>}, {pipeline_mode = #tpu.pipeline_mode<synchronous>, transform_indices = @transform_5, window_bounds = array<i64: 32, 32>}, {pipeline_mode = #tpu.pipeline_mode<synchronous>, transform_indices = @transform_6, window_bounds = array<i64: 32, 32>}, {pipeline_mode = #tpu.pipeline_mode<synchronous>, transform_indices = @transform_7, window_bounds = array<i64: 1, 32>}, {pipeline_mode = #tpu.pipeline_mode<synchronous>, transform_indices = @transform_8, window_bounds = array<i64: 1, 32>}, {transform_indices = @transform_9, window_bounds = array<i64: 2, 8, 32>}]} {
    %c0 = arith.constant 0 : index
    %c0_0 = arith.constant 0 : index
    %c0_1 = arith.constant 0 : index
    %0 = vector.load %arg1[%c0, %c0_0, %c0_1] : memref<2x8x32xf32, #tpu.memory_space<vmem>>, vector<2x8x32xf32>
    %1 = vector.shape_cast %0 : vector<2x8x32xf32> to vector<16x32xf32>
    %c0_2 = arith.constant 0 : index
    %c0_3 = arith.constant 0 : index
    %c0_4 = arith.constant 0 : index
    %2 = vector.load %arg2[%c0_2, %c0_3, %c0_4] : memref<2x8x32xf32, #tpu.memory_space<vmem>>, vector<2x8x32xf32>
    %3 = vector.shape_cast %2 : vector<2x8x32xf32> to vector<16x32xf32>
    %c0_5 = arith.constant 0 : index
    %c0_6 = arith.constant 0 : index
    %c0_7 = arith.constant 0 : index
    %4 = vector.load %arg3[%c0_5, %c0_6, %c0_7] : memref<2x8x32xf32, #tpu.memory_space<vmem>>, vector<2x8x32xf32>
    %5 = vector.shape_cast %4 : vector<2x8x32xf32> to vector<16x32xf32>
    %6 = arith.truncf %1 : vector<16x32xf32> to vector<16x32xbf16>
    %c0_8 = arith.constant 0 : index
    %c0_9 = arith.constant 0 : index
    %7 = vector.load %arg4[%c0_8, %c0_9] : memref<32x32xf32, #tpu.memory_space<vmem>>, vector<32x32xf32>
    %8 = arith.truncf %7 : vector<32x32xf32> to vector<32x32xbf16>
    %cst = arith.constant dense<0.000000e+00> : vector<16x32xf32>
    %9 = tpu.matmul %6, %8, %cst {dimension_numbers = #tpu.dot_dimension_numbers<[1], [0], [0], [1], [0, 0, 1, 1], [], []>} : vector<16x32xbf16>, vector<32x32xbf16>, vector<16x32xf32> -> vector<16x32xf32>
    %cst_10 = arith.constant 0.353553385 : f32
    %10 = vector.broadcast %cst_10 : f32 to vector<16x32xf32>
    %11 = arith.mulf %9, %10 : vector<16x32xf32>
    %12 = arith.truncf %3 : vector<16x32xf32> to vector<16x32xbf16>
    %c0_11 = arith.constant 0 : index
    %c0_12 = arith.constant 0 : index
    %13 = vector.load %arg5[%c0_11, %c0_12] : memref<32x32xf32, #tpu.memory_space<vmem>>, vector<32x32xf32>
    %14 = arith.truncf %13 : vector<32x32xf32> to vector<32x32xbf16>
    %cst_13 = arith.constant dense<0.000000e+00> : vector<16x32xf32>
    %15 = tpu.matmul %12, %14, %cst_13 {dimension_numbers = #tpu.dot_dimension_numbers<[1], [0], [0], [1], [0, 0, 1, 1], [], []>} : vector<16x32xbf16>, vector<32x32xbf16>, vector<16x32xf32> -> vector<16x32xf32>
    %16 = arith.truncf %5 : vector<16x32xf32> to vector<16x32xbf16>
    %c0_14 = arith.constant 0 : index
    %c0_15 = arith.constant 0 : index
    %17 = vector.load %arg6[%c0_14, %c0_15] : memref<32x32xf32, #tpu.memory_space<vmem>>, vector<32x32xf32>
    %18 = arith.truncf %17 : vector<32x32xf32> to vector<32x32xbf16>
    %cst_16 = arith.constant dense<0.000000e+00> : vector<16x32xf32>
    %19 = tpu.matmul %16, %18, %cst_16 {dimension_numbers = #tpu.dot_dimension_numbers<[1], [0], [0], [1], [0, 0, 1, 1], [], []>} : vector<16x32xbf16>, vector<32x32xbf16>, vector<16x32xf32> -> vector<16x32xf32>
    %20 = arith.truncf %11 : vector<16x32xf32> to vector<16x32xbf16>
    %21 = vector.shape_cast %20 : vector<16x32xbf16> to vector<2x8x32xbf16>
    %22 = arith.truncf %15 : vector<16x32xf32> to vector<16x32xbf16>
    %23 = vector.shape_cast %22 : vector<16x32xbf16> to vector<2x8x32xbf16>
    %24 = arith.truncf %19 : vector<16x32xf32> to vector<16x32xbf16>
    %25 = vector.shape_cast %24 : vector<16x32xbf16> to vector<2x8x32xbf16>
    %c0_17 = arith.constant 0 : index
    %c0_18 = arith.constant 0 : index
    %26 = vector.load %arg7[%c0_17, %c0_18] : memref<32x32xf32, #tpu.memory_space<vmem>>, vector<32x32xf32>
    %27 = arith.truncf %26 : vector<32x32xf32> to vector<32x32xbf16>
    %cst_19 = arith.constant 0.000000e+00 : f32
    %28 = vector.broadcast %cst_19 : f32 to vector<16x32xf32>
    %29 = vector.extract_strided_slice %21 {offsets = [0, 0, 0], sizes = [2, 8, 8], strides = [1, 1, 1]} : vector<2x8x32xbf16> to vector<2x8x8xbf16>
    %30 = vector.extract_strided_slice %23 {offsets = [0, 0, 0], sizes = [2, 8, 8], strides = [1, 1, 1]} : vector<2x8x32xbf16> to vector<2x8x8xbf16>
    %31 = vector.extract_strided_slice %25 {offsets = [0, 0, 0], sizes = [2, 8, 8], strides = [1, 1, 1]} : vector<2x8x32xbf16> to vector<2x8x8xbf16>
    %cst_20 = arith.constant dense<0.000000e+00> : vector<2x8x8xf32>
    %32 = tpu.matmul %29, %30, %cst_20 {dimension_numbers = #tpu.dot_dimension_numbers<[2], [2], [1], [1], [0, 0, 0, 1, 1, 1], [0], [0]>} : vector<2x8x8xbf16>, vector<2x8x8xbf16>, vector<2x8x8xf32> -> vector<2x8x8xf32>
    %cst_21 = arith.constant dense<0xFF800000> : vector<2x8xf32>
    %33 = vector.multi_reduction <maximumf>, %32, %cst_21 [2] : vector<2x8x8xf32> to vector<2x8xf32>
    %34 = vector.shape_cast %33 : vector<2x8xf32> to vector<2x8x1xf32>
    %35 = vector.broadcast %34 : vector<2x8x1xf32> to vector<2x8x8xf32>
    %36 = arith.subf %32, %35 : vector<2x8x8xf32>
    %37 = math.exp %36 : vector<2x8x8xf32>
    %cst_22 = arith.constant dense<0.000000e+00> : vector<2x8xf32>
    %38 = vector.multi_reduction <add>, %37, %cst_22 [2] : vector<2x8x8xf32> to vector<2x8xf32>
    %39 = vector.shape_cast %38 : vector<2x8xf32> to vector<2x8x1xf32>
    %40 = tpu.reciprocal %39 {approx = true} : vector<2x8x1xf32> -> vector<2x8x1xf32>
    %41 = vector.broadcast %40 : vector<2x8x1xf32> to vector<2x8x8xf32>
    %42 = arith.mulf %37, %41 : vector<2x8x8xf32>
    %43 = arith.truncf %42 : vector<2x8x8xf32> to vector<2x8x8xbf16>
    %cst_23 = arith.constant dense<0.000000e+00> : vector<2x8x8xf32>
    %44 = tpu.matmul %43, %31, %cst_23 {dimension_numbers = #tpu.dot_dimension_numbers<[2], [1], [1], [2], [0, 0, 0, 1, 1, 2], [0], [0]>} : vector<2x8x8xbf16>, vector<2x8x8xbf16>, vector<2x8x8xf32> -> vector<2x8x8xf32>
    %45 = vector.extract_strided_slice %27 {offsets = [0, 0], sizes = [8, 32], strides = [1, 1]} : vector<32x32xbf16> to vector<8x32xbf16>
    %46 = arith.truncf %44 : vector<2x8x8xf32> to vector<2x8x8xbf16>
    %47 = vector.shape_cast %46 : vector<2x8x8xbf16> to vector<16x8xbf16>
    %cst_24 = arith.constant dense<0.000000e+00> : vector<16x32xf32>
    %48 = tpu.matmul %47, %45, %cst_24 {dimension_numbers = #tpu.dot_dimension_numbers<[1], [0], [0], [1], [0, 0, 1, 1], [], []>} : vector<16x8xbf16>, vector<8x32xbf16>, vector<16x32xf32> -> vector<16x32xf32>
    %49 = arith.addf %28, %48 : vector<16x32xf32>
    %50 = vector.extract_strided_slice %21 {offsets = [0, 0, 8], sizes = [2, 8, 8], strides = [1, 1, 1]} : vector<2x8x32xbf16> to vector<2x8x8xbf16>
    %51 = vector.extract_strided_slice %23 {offsets = [0, 0, 8], sizes = [2, 8, 8], strides = [1, 1, 1]} : vector<2x8x32xbf16> to vector<2x8x8xbf16>
    %52 = vector.extract_strided_slice %25 {offsets = [0, 0, 8], sizes = [2, 8, 8], strides = [1, 1, 1]} : vector<2x8x32xbf16> to vector<2x8x8xbf16>
    %cst_25 = arith.constant dense<0.000000e+00> : vector<2x8x8xf32>
    %53 = tpu.matmul %50, %51, %cst_25 {dimension_numbers = #tpu.dot_dimension_numbers<[2], [2], [1], [1], [0, 0, 0, 1, 1, 1], [0], [0]>} : vector<2x8x8xbf16>, vector<2x8x8xbf16>, vector<2x8x8xf32> -> vector<2x8x8xf32>
    %cst_26 = arith.constant dense<0xFF800000> : vector<2x8xf32>
    %54 = vector.multi_reduction <maximumf>, %53, %cst_26 [2] : vector<2x8x8xf32> to vector<2x8xf32>
    %55 = vector.shape_cast %54 : vector<2x8xf32> to vector<2x8x1xf32>
    %56 = vector.broadcast %55 : vector<2x8x1xf32> to vector<2x8x8xf32>
    %57 = arith.subf %53, %56 : vector<2x8x8xf32>
    %58 = math.exp %57 : vector<2x8x8xf32>
    %cst_27 = arith.constant dense<0.000000e+00> : vector<2x8xf32>
    %59 = vector.multi_reduction <add>, %58, %cst_27 [2] : vector<2x8x8xf32> to vector<2x8xf32>
    %60 = vector.shape_cast %59 : vector<2x8xf32> to vector<2x8x1xf32>
    %61 = tpu.reciprocal %60 {approx = true} : vector<2x8x1xf32> -> vector<2x8x1xf32>
    %62 = vector.broadcast %61 : vector<2x8x1xf32> to vector<2x8x8xf32>
    %63 = arith.mulf %58, %62 : vector<2x8x8xf32>
    %64 = arith.truncf %63 : vector<2x8x8xf32> to vector<2x8x8xbf16>
    %cst_28 = arith.constant dense<0.000000e+00> : vector<2x8x8xf32>
    %65 = tpu.matmul %64, %52, %cst_28 {dimension_numbers = #tpu.dot_dimension_numbers<[2], [1], [1], [2], [0, 0, 0, 1, 1, 2], [0], [0]>} : vector<2x8x8xbf16>, vector<2x8x8xbf16>, vector<2x8x8xf32> -> vector<2x8x8xf32>
    %66 = vector.extract_strided_slice %27 {offsets = [8, 0], sizes = [8, 32], strides = [1, 1]} : vector<32x32xbf16> to vector<8x32xbf16>
    %67 = arith.truncf %65 : vector<2x8x8xf32> to vector<2x8x8xbf16>
    %68 = vector.shape_cast %67 : vector<2x8x8xbf16> to vector<16x8xbf16>
    %cst_29 = arith.constant dense<0.000000e+00> : vector<16x32xf32>
    %69 = tpu.matmul %68, %66, %cst_29 {dimension_numbers = #tpu.dot_dimension_numbers<[1], [0], [0], [1], [0, 0, 1, 1], [], []>} : vector<16x8xbf16>, vector<8x32xbf16>, vector<16x32xf32> -> vector<16x32xf32>
    %70 = arith.addf %49, %69 : vector<16x32xf32>
    %71 = vector.extract_strided_slice %21 {offsets = [0, 0, 16], sizes = [2, 8, 8], strides = [1, 1, 1]} : vector<2x8x32xbf16> to vector<2x8x8xbf16>
    %72 = vector.extract_strided_slice %23 {offsets = [0, 0, 16], sizes = [2, 8, 8], strides = [1, 1, 1]} : vector<2x8x32xbf16> to vector<2x8x8xbf16>
    %73 = vector.extract_strided_slice %25 {offsets = [0, 0, 16], sizes = [2, 8, 8], strides = [1, 1, 1]} : vector<2x8x32xbf16> to vector<2x8x8xbf16>
    %cst_30 = arith.constant dense<0.000000e+00> : vector<2x8x8xf32>
    %74 = tpu.matmul %71, %72, %cst_30 {dimension_numbers = #tpu.dot_dimension_numbers<[2], [2], [1], [1], [0, 0, 0, 1, 1, 1], [0], [0]>} : vector<2x8x8xbf16>, vector<2x8x8xbf16>, vector<2x8x8xf32> -> vector<2x8x8xf32>
    %cst_31 = arith.constant dense<0xFF800000> : vector<2x8xf32>
    %75 = vector.multi_reduction <maximumf>, %74, %cst_31 [2] : vector<2x8x8xf32> to vector<2x8xf32>
    %76 = vector.shape_cast %75 : vector<2x8xf32> to vector<2x8x1xf32>
    %77 = vector.broadcast %76 : vector<2x8x1xf32> to vector<2x8x8xf32>
    %78 = arith.subf %74, %77 : vector<2x8x8xf32>
    %79 = math.exp %78 : vector<2x8x8xf32>
    %cst_32 = arith.constant dense<0.000000e+00> : vector<2x8xf32>
    %80 = vector.multi_reduction <add>, %79, %cst_32 [2] : vector<2x8x8xf32> to vector<2x8xf32>
    %81 = vector.shape_cast %80 : vector<2x8xf32> to vector<2x8x1xf32>
    %82 = tpu.reciprocal %81 {approx = true} : vector<2x8x1xf32> -> vector<2x8x1xf32>
    %83 = vector.broadcast %82 : vector<2x8x1xf32> to vector<2x8x8xf32>
    %84 = arith.mulf %79, %83 : vector<2x8x8xf32>
    %85 = arith.truncf %84 : vector<2x8x8xf32> to vector<2x8x8xbf16>
    %cst_33 = arith.constant dense<0.000000e+00> : vector<2x8x8xf32>
    %86 = tpu.matmul %85, %73, %cst_33 {dimension_numbers = #tpu.dot_dimension_numbers<[2], [1], [1], [2], [0, 0, 0, 1, 1, 2], [0], [0]>} : vector<2x8x8xbf16>, vector<2x8x8xbf16>, vector<2x8x8xf32> -> vector<2x8x8xf32>
    %87 = vector.extract_strided_slice %27 {offsets = [16, 0], sizes = [8, 32], strides = [1, 1]} : vector<32x32xbf16> to vector<8x32xbf16>
    %88 = arith.truncf %86 : vector<2x8x8xf32> to vector<2x8x8xbf16>
    %89 = vector.shape_cast %88 : vector<2x8x8xbf16> to vector<16x8xbf16>
    %cst_34 = arith.constant dense<0.000000e+00> : vector<16x32xf32>
    %90 = tpu.matmul %89, %87, %cst_34 {dimension_numbers = #tpu.dot_dimension_numbers<[1], [0], [0], [1], [0, 0, 1, 1], [], []>} : vector<16x8xbf16>, vector<8x32xbf16>, vector<16x32xf32> -> vector<16x32xf32>
    %91 = arith.addf %70, %90 : vector<16x32xf32>
    %92 = vector.extract_strided_slice %21 {offsets = [0, 0, 24], sizes = [2, 8, 8], strides = [1, 1, 1]} : vector<2x8x32xbf16> to vector<2x8x8xbf16>
    %93 = vector.extract_strided_slice %23 {offsets = [0, 0, 24], sizes = [2, 8, 8], strides = [1, 1, 1]} : vector<2x8x32xbf16> to vector<2x8x8xbf16>
    %94 = vector.extract_strided_slice %25 {offsets = [0, 0, 24], sizes = [2, 8, 8], strides = [1, 1, 1]} : vector<2x8x32xbf16> to vector<2x8x8xbf16>
    %cst_35 = arith.constant dense<0.000000e+00> : vector<2x8x8xf32>
    %95 = tpu.matmul %92, %93, %cst_35 {dimension_numbers = #tpu.dot_dimension_numbers<[2], [2], [1], [1], [0, 0, 0, 1, 1, 1], [0], [0]>} : vector<2x8x8xbf16>, vector<2x8x8xbf16>, vector<2x8x8xf32> -> vector<2x8x8xf32>
    %cst_36 = arith.constant dense<0xFF800000> : vector<2x8xf32>
    %96 = vector.multi_reduction <maximumf>, %95, %cst_36 [2] : vector<2x8x8xf32> to vector<2x8xf32>
    %97 = vector.shape_cast %96 : vector<2x8xf32> to vector<2x8x1xf32>
    %98 = vector.broadcast %97 : vector<2x8x1xf32> to vector<2x8x8xf32>
    %99 = arith.subf %95, %98 : vector<2x8x8xf32>
    %100 = math.exp %99 : vector<2x8x8xf32>
    %cst_37 = arith.constant dense<0.000000e+00> : vector<2x8xf32>
    %101 = vector.multi_reduction <add>, %100, %cst_37 [2] : vector<2x8x8xf32> to vector<2x8xf32>
    %102 = vector.shape_cast %101 : vector<2x8xf32> to vector<2x8x1xf32>
    %103 = tpu.reciprocal %102 {approx = true} : vector<2x8x1xf32> -> vector<2x8x1xf32>
    %104 = vector.broadcast %103 : vector<2x8x1xf32> to vector<2x8x8xf32>
    %105 = arith.mulf %100, %104 : vector<2x8x8xf32>
    %106 = arith.truncf %105 : vector<2x8x8xf32> to vector<2x8x8xbf16>
    %cst_38 = arith.constant dense<0.000000e+00> : vector<2x8x8xf32>
    %107 = tpu.matmul %106, %94, %cst_38 {dimension_numbers = #tpu.dot_dimension_numbers<[2], [1], [1], [2], [0, 0, 0, 1, 1, 2], [0], [0]>} : vector<2x8x8xbf16>, vector<2x8x8xbf16>, vector<2x8x8xf32> -> vector<2x8x8xf32>
    %108 = vector.extract_strided_slice %27 {offsets = [24, 0], sizes = [8, 32], strides = [1, 1]} : vector<32x32xbf16> to vector<8x32xbf16>
    %109 = arith.truncf %107 : vector<2x8x8xf32> to vector<2x8x8xbf16>
    %110 = vector.shape_cast %109 : vector<2x8x8xbf16> to vector<16x8xbf16>
    %cst_39 = arith.constant dense<0.000000e+00> : vector<16x32xf32>
    %111 = tpu.matmul %110, %108, %cst_39 {dimension_numbers = #tpu.dot_dimension_numbers<[1], [0], [0], [1], [0, 0, 1, 1], [], []>} : vector<16x8xbf16>, vector<8x32xbf16>, vector<16x32xf32> -> vector<16x32xf32>
    %112 = arith.addf %91, %111 : vector<16x32xf32>
    %113 = arith.addf %1, %112 : vector<16x32xf32>
    %cst_40 = arith.constant dense<0.000000e+00> : vector<16xf32>
    %114 = vector.multi_reduction <add>, %113, %cst_40 [1] : vector<16x32xf32> to vector<16xf32>
    %115 = vector.shape_cast %114 : vector<16xf32> to vector<16x1xf32>
    %cst_41 = arith.constant 3.200000e+01 : f32
    %116 = vector.broadcast %cst_41 : f32 to vector<16x1xf32>
    %117 = arith.divf %115, %116 : vector<16x1xf32>
    %118 = vector.broadcast %117 : vector<16x1xf32> to vector<16x32xf32>
    %119 = arith.subf %113, %118 : vector<16x32xf32>
    %120 = arith.mulf %119, %119 : vector<16x32xf32>
    %cst_42 = arith.constant dense<0.000000e+00> : vector<16xf32>
    %121 = vector.multi_reduction <add>, %120, %cst_42 [1] : vector<16x32xf32> to vector<16xf32>
    %122 = vector.shape_cast %121 : vector<16xf32> to vector<16x1xf32>
    %cst_43 = arith.constant 3.200000e+01 : f32
    %123 = vector.broadcast %cst_43 : f32 to vector<16x1xf32>
    %124 = arith.divf %122, %123 : vector<16x1xf32>
    %cst_44 = arith.constant 9.99999997E-7 : f32
    %125 = vector.broadcast %cst_44 : f32 to vector<16x1xf32>
    %126 = arith.addf %124, %125 : vector<16x1xf32>
    %127 = math.rsqrt %126 : vector<16x1xf32>
    %128 = vector.broadcast %127 : vector<16x1xf32> to vector<16x32xf32>
    %129 = arith.mulf %119, %128 : vector<16x32xf32>
    %c0_45 = arith.constant 0 : index
    %c0_46 = arith.constant 0 : index
    %130 = vector.load %arg8[%c0_45, %c0_46] : memref<1x32xf32, #tpu.memory_space<vmem>>, vector<1x32xf32>
    %131 = vector.broadcast %130 : vector<1x32xf32> to vector<16x32xf32>
    %132 = arith.mulf %129, %131 : vector<16x32xf32>
    %c0_47 = arith.constant 0 : index
    %c0_48 = arith.constant 0 : index
    %133 = vector.load %arg9[%c0_47, %c0_48] : memref<1x32xf32, #tpu.memory_space<vmem>>, vector<1x32xf32>
    %134 = vector.broadcast %133 : vector<1x32xf32> to vector<16x32xf32>
    %135 = arith.addf %132, %134 : vector<16x32xf32>
    %136 = vector.shape_cast %135 : vector<16x32xf32> to vector<2x8x32xf32>
    %c0_49 = arith.constant 0 : index
    %c0_50 = arith.constant 0 : index
    %c0_51 = arith.constant 0 : index
    %137 = vector.load %arg10[%c0_49, %c0_50, %c0_51] : memref<2x8x32xf32, #tpu.memory_space<vmem>>, vector<2x8x32xf32>
    tpu.vector_store %arg10[%c0_49, %c0_50, %c0_51], %136 {strides = array<i32>} : memref<2x8x32xf32, #tpu.memory_space<vmem>>, vector<2x8x32xf32>,
    return
  }
  func.func @transform_0(%arg0: i32) -> (i32, i32, i32) {
    %c0_i32 = arith.constant 0 : i32
    %c0_i32_0 = arith.constant 0 : i32
    %c0_i32_1 = arith.constant 0 : i32
    return %arg0, %c0_i32, %c0_i32_0 : i32, i32, i32
  }
  func.func @transform_1(%arg0: i32) -> (i32, i32, i32) {
    %c0_i32 = arith.constant 0 : i32
    %c0_i32_0 = arith.constant 0 : i32
    %c0_i32_1 = arith.constant 0 : i32
    return %arg0, %c0_i32, %c0_i32_0 : i32, i32, i32
  }
  func.func @transform_2(%arg0: i32) -> (i32, i32, i32) {
    %c0_i32 = arith.constant 0 : i32
    %c0_i32_0 = arith.constant 0 : i32
    %c0_i32_1 = arith.constant 0 : i32
    return %arg0, %c0_i32, %c0_i32_0 : i32, i32, i32
  }
  func.func @transform_3(%arg0: i32) -> (i32, i32) {
    %c0_i32 = arith.constant 0 : i32
    %c0_i32_0 = arith.constant 0 : i32
    %c0_i32_1 = arith.constant 0 : i32
    return %c0_i32, %c0_i32_0 : i32, i32
  }
  func.func @transform_4(%arg0: i32) -> (i32, i32) {
    %c0_i32 = arith.constant 0 : i32
    %c0_i32_0 = arith.constant 0 : i32
    %c0_i32_1 = arith.constant 0 : i32
    return %c0_i32, %c0_i32_0 : i32, i32
  }
  func.func @transform_5(%arg0: i32) -> (i32, i32) {
    %c0_i32 = arith.constant 0 : i32
    %c0_i32_0 = arith.constant 0 : i32
    %c0_i32_1 = arith.constant 0 : i32
    return %c0_i32, %c0_i32_0 : i32, i32
  }
  func.func @transform_6(%arg0: i32) -> (i32, i32) {
    %c0_i32 = arith.constant 0 : i32
    %c0_i32_0 = arith.constant 0 : i32
    %c0_i32_1 = arith.constant 0 : i32
    return %c0_i32, %c0_i32_0 : i32, i32
  }
  func.func @transform_7(%arg0: i32) -> (i32, i32) {
    %c0_i32 = arith.constant 0 : i32
    %c0_i32_0 = arith.constant 0 : i32
    %c0_i32_1 = arith.constant 0 : i32
    return %c0_i32, %c0_i32_0 : i32, i32
  }
  func.func @transform_8(%arg0: i32) -> (i32, i32) {
    %c0_i32 = arith.constant 0 : i32
    %c0_i32_0 = arith.constant 0 : i32
    %c0_i32_1 = arith.constant 0 : i32
    return %c0_i32, %c0_i32_0 : i32, i32
  }
  func.func @transform_9(%arg0: i32) -> (i32, i32, i32) {
    %c0_i32 = arith.constant 0 : i32
    %c0_i32_0 = arith.constant 0 : i32
    %c0_i32_1 = arith.constant 0 : i32
    return %arg0, %c0_i32, %c0_i32_0 : i32, i32, i32
  }
}

</mosaic_0001>

<llo_original>
// kernel: tpu_custom_call.1
$region0: #{tpu_custom_call.1}
  #allocation0 [shape = 'u32[]', space=smem, size = 0x4, offset = 0x4, fixed_abs, tag = 'smem constant byte address 0x4 - core index']
  #allocation1 [shape = 'u32[144,128]{1,0:T(1,128)}', space=vmem, size = 0x12000, scoped, tag = 'internal scratch']
  %s0 = inlined_call_operand.hbm [shape: f32[2,8,32], index: 0, kind: input, shape index: {}]
  %s1 = inlined_call_operand.hbm [shape: f32[2,8,32], index: 1, kind: input, shape index: {}]
  %s2 = inlined_call_operand.hbm [shape: f32[2,8,32], index: 2, kind: input, shape index: {}]
  %s3 = inlined_call_operand.hbm [shape: f32[32,32], index: 3, kind: input, shape index: {}]
  %s4 = inlined_call_operand.hbm [shape: f32[32,32], index: 4, kind: input, shape index: {}]
  %s5 = inlined_call_operand.hbm [shape: f32[32,32], index: 5, kind: input, shape index: {}]
  %s6 = inlined_call_operand.hbm [shape: f32[32,32], index: 6, kind: input, shape index: {}]
  %s7 = inlined_call_operand.vmem [shape: f32[1,32], index: 7, kind: input, shape index: {}]
  %s8 = inlined_call_operand.vmem [shape: f32[1,32], index: 8, kind: input, shape index: {}]
  %s9 = inlined_call_operand.hbm [shape: f32[2,8,32], index: 9, kind: output, shape index: {}]
  %s10 = sld [smem:[#allocation0]]
  $region74: #{tpu_custom_call.1} parent=0
    _
  %s12 = ssub.s32 1, %s10
  %s13 = scalar_select 0, %s12, %s10
  $region1: #{tpu_custom_call.1} parent=0
    #allocation2 [shape = 'u8[8192]{0}', space=vmem, size = 0x2000, scoped, tag = 'input window, operand 0, single buffered']
    #allocation3 [shape = 's32[1]{0}', space=sflag, size = 0x4, scoped, tag = 'scoped memory for tpu_custom_call.1']
    #allocation4 [shape = 's32[1]{0}', space=sflag, size = 0x4, scoped, tag = 'scoped memory for tpu_custom_call.1']
    #allocation5 [shape = 'u8[8192]{0}', space=vmem, size = 0x2000, scoped, tag = 'input window, operand 1, single buffered']
    #allocation6 [shape = 's32[1]{0}', space=sflag, size = 0x4, scoped, tag = 'scoped memory for tpu_custom_call.1']
    #allocation7 [shape = 'u8[8192]{0}', space=vmem, size = 0x2000, scoped, tag = 'input window, operand 2, single buffered']
    #allocation8 [shape = 'u8[16384]{0}', space=vmem, size = 0x4000, scoped, tag = 'input window, operand 3, single buffered']
    #allocation9 [shape = 's32[1]{0}', space=sflag, size = 0x4, scoped, tag = 'scoped memory for tpu_custom_call.1']
    #allocation10 [shape = 'u8[16384]{0}', space=vmem, size = 0x4000, scoped, tag = 'input window, operand 4, single buffered']
    #allocation11 [shape = 'u8[16384]{0}', space=vmem, size = 0x4000, scoped, tag = 'input window, operand 5, single buffered']
    #allocation12 [shape = 's32[1]{0}', space=sflag, size = 0x4, scoped, tag = 'scoped memory for tpu_custom_call.1']
    #allocation13 [shape = 'u8[16384]{0}', space=vmem, size = 0x4000, scoped, tag = 'input window, operand 6, single buffered']
    #allocation14 [shape = 'u8[8192]{0}', space=vmem, size = 0x2000, scoped, tag = 'output window, operand 0, single buffered']
    %14 = vsyncpa [#allocation3], 0
    %15 = vsyncpa [#allocation6], 0
    %16 = vsyncpa [#allocation9], 0
    %17 = vsyncpa [#allocation12], 0
    %18 = vsyncpa [#allocation4], 0
    // Predicated region
    $region2: #{tpu_custom_call.1} parent=1 // pred_check
      _
    $region3: #{tpu_custom_call.1} parent=1 // pred_check_branch
      %20 = sbr.rel (0) target = $region5
    $region4: #{tpu_custom_call.1} parent=1 // pred_region
      %s22 = ssub.s32 256, 256
      %23 = vsyncadd [#allocation3], %s22
      %s24 = sshll.u32 [#allocation2], 4
      %s25 = int_to_ptr.vmem [resolvable:$true] %s24
      %30 = dma.hbm_to_vmem [thread:$0]  %s0, 256, %s25, [#allocation3], 128, 128, 8
    $region5: #{tpu_custom_call.1} parent=1 // pred_fallthru
      _
    // Predicated region
    $region6: #{tpu_custom_call.1} parent=1 // pred_check
      _
    $region7: #{tpu_custom_call.1} parent=1 // pred_check_branch
      %32 = sbr.rel (0) target = $region9
    $region8: #{tpu_custom_call.1} parent=1 // pred_region
      %s34 = ssub.s32 256, 256
      %35 = vsyncadd [#allocation6], %s34
      %s36 = sshll.u32 [#allocation5], 4
      %s37 = int_to_ptr.vmem [resolvable:$true] %s36
      %42 = dma.hbm_to_vmem [thread:$0]  %s1, 256, %s37, [#allocation6], 128, 128, 8
    $region9: #{tpu_custom_call.1} parent=1 // pred_fallthru
      _
    // Predicated region
    $region10: #{tpu_custom_call.1} parent=1 // pred_check
      _
    $region11: #{tpu_custom_call.1} parent=1 // pred_check_branch
      %44 = sbr.rel (0) target = $region13
    $region12: #{tpu_custom_call.1} parent=1 // pred_region
      %s46 = ssub.s32 256, 256
      %47 = vsyncadd [#allocation6], %s46
      %s48 = sshll.u32 [#allocation7], 4
      %s49 = int_to_ptr.vmem [resolvable:$true] %s48
      %54 = dma.hbm_to_vmem [thread:$0]  %s2, 256, %s49, [#allocation6], 128, 128, 8
    $region13: #{tpu_custom_call.1} parent=1 // pred_fallthru
      _
    // Predicated region
    $region14: #{tpu_custom_call.1} parent=1 // pred_check
      _
    $region15: #{tpu_custom_call.1} parent=1 // pred_check_branch
      %56 = sbr.rel (0) target = $region17
    $region16: #{tpu_custom_call.1} parent=1 // pred_region
      %s58 = ssub.s32 512, 512
      %59 = vsyncadd [#allocation9], %s58
      %s60 = sshll.u32 [#allocation8], 4
      %s61 = int_to_ptr.vmem [resolvable:$true] %s60
      %66 = dma.hbm_to_vmem [thread:$0]  %s3, 512, %s61, [#allocation9], 128, 128, 8
    $region17: #{tpu_custom_call.1} parent=1 // pred_fallthru
      _
    // Predicated region
    $region18: #{tpu_custom_call.1} parent=1 // pred_check
      _
    $region19: #{tpu_custom_call.1} parent=1 // pred_check_branch
      %68 = sbr.rel (0) target = $region21
    $region20: #{tpu_custom_call.1} parent=1 // pred_region
      %s70 = ssub.s32 512, 512
      %71 = vsyncadd [#allocation9], %s70
      %s72 = sshll.u32 [#allocation10], 4
      %s73 = int_to_ptr.vmem [resolvable:$true] %s72
      %78 = dma.hbm_to_vmem [thread:$0]  %s4, 512, %s73, [#allocation9], 128, 128, 8
    $region21: #{tpu_custom_call.1} parent=1 // pred_fallthru
      _
    // Predicated region
    $region22: #{tpu_custom_call.1} parent=1 // pred_check
      _
    $region23: #{tpu_custom_call.1} parent=1 // pred_check_branch
      %80 = sbr.rel (0) target = $region25
    $region24: #{tpu_custom_call.1} parent=1 // pred_region
      %s82 = ssub.s32 512, 512
      %83 = vsyncadd [#allocation12], %s82
      %s84 = sshll.u32 [#allocation11], 4
      %s85 = int_to_ptr.vmem [resolvable:$true] %s84
      %90 = dma.hbm_to_vmem [thread:$0]  %s5, 512, %s85, [#allocation12], 128, 128, 8
    $region25: #{tpu_custom_call.1} parent=1 // pred_fallthru
      _
    // Predicated region
    $region26: #{tpu_custom_call.1} parent=1 // pred_check
      _
    $region27: #{tpu_custom_call.1} parent=1 // pred_check_branch
      %92 = sbr.rel (0) target = $region29
    $region28: #{tpu_custom_call.1} parent=1 // pred_region
      %s94 = ssub.s32 512, 512
      %95 = vsyncadd [#allocation12], %s94
      %s96 = sshll.u32 [#allocation13], 4
      %s97 = int_to_ptr.vmem [resolvable:$true] %s96
      %102 = dma.hbm_to_vmem [thread:$0]  %s6, 512, %s97, [#allocation12], 128, 128, 8
    $region29: #{tpu_custom_call.1} parent=1 // pred_fallthru
      _
    // Predicated region
    $region30: #{tpu_custom_call.1} parent=1 // pred_check
      _
    $region31: #{tpu_custom_call.1} parent=1 // pred_check_branch
      %104 = sbr.rel (0) target = $region33
    $region32: #{tpu_custom_call.1} parent=1 // pred_region
      _
    $region33: #{tpu_custom_call.1} parent=1 // pred_fallthru
      _
    // Predicated region
    $region34: #{tpu_custom_call.1} parent=1 // pred_check
      _
    $region35: #{tpu_custom_call.1} parent=1 // pred_check_branch
      %106 = sbr.rel (0) target = $region37
    $region36: #{tpu_custom_call.1} parent=1 // pred_region
      _
    $region37: #{tpu_custom_call.1} parent=1 // pred_fallthru
      _
    // Predicated region
    $region38: #{tpu_custom_call.1} parent=1 // pred_check
      _
    $region39: #{tpu_custom_call.1} parent=1 // pred_check_branch
      %108 = sbr.rel (0) target = $region41
    $region40: #{tpu_custom_call.1} parent=1 // pred_region
      %109 = dma.done [#allocation3], 256
    $region41: #{tpu_custom_call.1} parent=1 // pred_fallthru
      _
    // Predicated region
    $region42: #{tpu_custom_call.1} parent=1 // pred_check
      _
    $region43: #{tpu_custom_call.1} parent=1 // pred_check_branch
      %111 = sbr.rel (0) target = $region45
    $region44: #{tpu_custom_call.1} parent=1 // pred_region
      %112 = dma.done [#allocation6], 256
    $region45: #{tpu_custom_call.1} parent=1 // pred_fallthru
      _
    // Predicated region
    $region46: #{tpu_custom_call.1} parent=1 // pred_check
      _
    $region47: #{tpu_custom_call.1} parent=1 // pred_check_branch
      %114 = sbr.rel (0) target = $region49
    $region48: #{tpu_custom_call.1} parent=1 // pred_region
      %115 = dma.done [#allocation6], 256
    $region49: #{tpu_custom_call.1} parent=1 // pred_fallthru
      _
    // Predicated region
    $region50: #{tpu_custom_call.1} parent=1 // pred_check
      _
    $region51: #{tpu_custom_call.1} parent=1 // pred_check_branch
      %117 = sbr.rel (0) target = $region53
    $region52: #{tpu_custom_call.1} parent=1 // pred_region
      %118 = dma.done [#allocation9], 512
    $region53: #{tpu_custom_call.1} parent=1 // pred_fallthru
      _
    // Predicated region
    $region54: #{tpu_custom_call.1} parent=1 // pred_check
      _
    $region55: #{tpu_custom_call.1} parent=1 // pred_check_branch
      %120 = sbr.rel (0) target = $region57
    $region56: #{tpu_custom_call.1} parent=1 // pred_region
      %121 = dma.done [#allocation9], 512
    $region57: #{tpu_custom_call.1} parent=1 // pred_fallthru
      _
    // Predicated region
    $region58: #{tpu_custom_call.1} parent=1 // pred_check
      _
    $region59: #{tpu_custom_call.1} parent=1 // pred_check_branch
      %123 = sbr.rel (0) target = $region61
    $region60: #{tpu_custom_call.1} parent=1 // pred_region
      %124 = dma.done [#allocation12], 512
    $region61: #{tpu_custom_call.1} parent=1 // pred_fallthru
      _
    // Predicated region
    $region62: #{tpu_custom_call.1} parent=1 // pred_check
      _
    $region63: #{tpu_custom_call.1} parent=1 // pred_check_branch
      %126 = sbr.rel (0) target = $region65
    $region64: #{tpu_custom_call.1} parent=1 // pred_region
      %127 = dma.done [#allocation12], 512
    $region65: #{tpu_custom_call.1} parent=1 // pred_fallthru
      _
    %v129 = vld [vmem:[#allocation2] sm:$0xff]
    %v130 = vld [vmem:[#allocation2 + $0x8] sm:$0xff]
    %v131 = vld [vmem:[#allocation5] sm:$0xff]
    %v132 = vld [vmem:[#allocation5 + $0x8] sm:$0xff]
    %v133 = vld [vmem:[#allocation7] sm:$0xff]
    %v134 = vld [vmem:[#allocation7 + $0x8] sm:$0xff]
    %v135 = vpack.c.bf16 %v130, %v129
    %v136 = vld [vmem:[#allocation8] sm:$0xff]
    %v137 = vld [vmem:[#allocation8 + $0x8] sm:$0xff]
    %v138 = vld [vmem:[#allocation8 + $0x10] sm:$0xff]
    %v139 = vld [vmem:[#allocation8 + $0x18] sm:$0xff]
    %v140 = vpack.c.bf16 %v137, %v136
    %v141 = vpack.c.bf16 %v139, %v138
    %vm142 = vcmask 261120
    %v144 = vsel %vm142, %v135, 0
    %146 = vmatprep.subr.bf16.mxu0 0
    %147 = vmatpush1.bf16.msra.mxu0 0
    %148 = vmatprep.subr.bf16.mxu0 0
    %149 = vmatpush1.bf16.msra.mxu0 0
    %150 = vmatprep.subr.bf16.mxu0 0
    %151 = vmatpush1.bf16.msra.mxu0 0
    %152 = vmatprep.subr.bf16.mxu0 0
    %153 = vmatpush1.bf16.msra.mxu0 0
    %154 = vmatprep.subr.bf16.mxu0 0
    %155 = vmatpush1.bf16.msra.mxu0 0
    %156 = vmatprep.subr.bf16.mxu0 0
    %157 = vmatpush1.bf16.msra.mxu0 0
    %158 = vmatprep.subr.bf16.mxu0 0
    %159 = vmatpush1.bf16.msra.mxu0 %v141
    %160 = vmatprep.subr.bf16.mxu0 0
    %161 = vmatpush1.bf16.msra.mxu0 %v140
    %162 = vmatprep.subr.bf16.mxu0 0
    %163 = vmatpush2.bf16.msra.mxu0 0
    %164 = vmatprep.subr.bf16.mxu0 0
    %165 = vmatpush2.bf16.msra.mxu0 0
    %166 = vmatprep.subr.bf16.mxu0 0
    %167 = vmatpush2.bf16.msra.mxu0 0
    %168 = vmatprep.subr.bf16.mxu0 0
    %169 = vmatpush2.bf16.msra.mxu0 0
    %170 = vmatprep.subr.bf16.mxu0 0
    %171 = vmatpush2.bf16.msra.mxu0 0
    %172 = vmatprep.subr.bf16.mxu0 0
    %173 = vmatpush2.bf16.msra.mxu0 0
    %174 = vmatprep.subr.bf16.mxu0 0
    %175 = vmatpush2.bf16.msra.mxu0 0
    %176 = vmatprep.subr.bf16.mxu0 0
    %177 = vmatpush2.bf16.msra.mxu0 0
    %178 = vmatprep.mubr.bf16.mxu0 0
    %179 = vmatmul.mubr.bf16.gmra.mxu0 %v144
    %v180 = vpop.f32.mrf.mxu0
    %v181 = vadd.f32 0.0, %v180
    %v182 = vpop.f32.mrf.mxu0
    %v183 = vpop.f32.mrf.mxu0
    %v184 = vadd.f32 0.0, %v183
    %v185 = vpop.f32.mrf.mxu0
    %186 = vdwg.mxu0
    %v187 = vmul.f32 %v181, 0.35355338
    %v188 = vmul.f32 %v184, 0.35355338
    %v189 = vpack.c.bf16 %v132, %v131
    %v190 = vld [vmem:[#allocation10] sm:$0xff]
    %v191 = vld [vmem:[#allocation10 + $0x8] sm:$0xff]
    %v192 = vld [vmem:[#allocation10 + $0x10] sm:$0xff]
    %v193 = vld [vmem:[#allocation10 + $0x18] sm:$0xff]
    %v194 = vpack.c.bf16 %v191, %v190
    %v195 = vpack.c.bf16 %v193, %v192
    %v197 = vsel %vm142, %v189, 0
    %199 = vmatprep.subr.bf16.mxu0 0
    %200 = vmatpush1.bf16.msra.mxu0 0
    %201 = vmatprep.subr.bf16.mxu0 0
    %202 = vmatpush1.bf16.msra.mxu0 0
    %203 = vmatprep.subr.bf16.mxu0 0
    %204 = vmatpush1.bf16.msra.mxu0 0
    %205 = vmatprep.subr.bf16.mxu0 0
    %206 = vmatpush1.bf16.msra.mxu0 0
    %207 = vmatprep.subr.bf16.mxu0 0
    %208 = vmatpush1.bf16.msra.mxu0 0
    %209 = vmatprep.subr.bf16.mxu0 0
    %210 = vmatpush1.bf16.msra.mxu0 0
    %211 = vmatprep.subr.bf16.mxu0 0
    %212 = vmatpush1.bf16.msra.mxu0 %v195
    %213 = vmatprep.subr.bf16.mxu0 0
    %214 = vmatpush1.bf16.msra.mxu0 %v194
    %215 = vmatprep.subr.bf16.mxu0 0
    %216 = vmatpush2.bf16.msra.mxu0 0
    %217 = vmatprep.subr.bf16.mxu0 0
    %218 = vmatpush2.bf16.msra.mxu0 0
    %219 = vmatprep.subr.bf16.mxu0 0
    %220 = vmatpush2.bf16.msra.mxu0 0
    %221 = vmatprep.subr.bf16.mxu0 0
    %222 = vmatpush2.bf16.msra.mxu0 0
    %223 = vmatprep.subr.bf16.mxu0 0
    %224 = vmatpush2.bf16.msra.mxu0 0
    %225 = vmatprep.subr.bf16.mxu0 0
    %226 = vmatpush2.bf16.msra.mxu0 0
    %227 = vmatprep.subr.bf16.mxu0 0
    %228 = vmatpush2.bf16.msra.mxu0 0
    %229 = vmatprep.subr.bf16.mxu0 0
    %230 = vmatpush2.bf16.msra.mxu0 0
    %231 = vmatprep.mubr.bf16.mxu0 0
    %232 = vmatmul.mubr.bf16.gmra.mxu0 %v197
    %v233 = vpop.f32.mrf.mxu0
    %v234 = vadd.f32 0.0, %v233
    %v235 = vpop.f32.mrf.mxu0
    %v236 = vpop.f32.mrf.mxu0
    %v237 = vadd.f32 0.0, %v236
    %v238 = vpop.f32.mrf.mxu0
    %239 = vdwg.mxu0
    %v240 = vpack.c.bf16 %v134, %v133
    %v241 = vld [vmem:[#allocation11] sm:$0xff]
    %v242 = vld [vmem:[#allocation11 + $0x8] sm:$0xff]
    %v243 = vld [vmem:[#allocation11 + $0x10] sm:$0xff]
    %v244 = vld [vmem:[#allocation11 + $0x18] sm:$0xff]
    %v245 = vpack.c.bf16 %v242, %v241
    %v246 = vpack.c.bf16 %v244, %v243
    %v248 = vsel %vm142, %v240, 0
    %250 = vmatprep.subr.bf16.mxu0 0
    %251 = vmatpush1.bf16.msra.mxu0 0
    %252 = vmatprep.subr.bf16.mxu0 0
    %253 = vmatpush1.bf16.msra.mxu0 0
    %254 = vmatprep.subr.bf16.mxu0 0
    %255 = vmatpush1.bf16.msra.mxu0 0
    %256 = vmatprep.subr.bf16.mxu0 0
    %257 = vmatpush1.bf16.msra.mxu0 0
    %258 = vmatprep.subr.bf16.mxu0 0
    %259 = vmatpush1.bf16.msra.mxu0 0
    %260 = vmatprep.subr.bf16.mxu0 0
    %261 = vmatpush1.bf16.msra.mxu0 0
    %262 = vmatprep.subr.bf16.mxu0 0
    %263 = vmatpush1.bf16.msra.mxu0 %v246
    %264 = vmatprep.subr.bf16.mxu0 0
    %265 = vmatpush1.bf16.msra.mxu0 %v245
    %266 = vmatprep.subr.bf16.mxu0 0
    %267 = vmatpush2.bf16.msra.mxu0 0
    %268 = vmatprep.subr.bf16.mxu0 0
    %269 = vmatpush2.bf16.msra.mxu0 0
    %270 = vmatprep.subr.bf16.mxu0 0
    %271 = vmatpush2.bf16.msra.mxu0 0
    %272 = vmatprep.subr.bf16.mxu0 0
    %273 = vmatpush2.bf16.msra.mxu0 0
    %274 = vmatprep.subr.bf16.mxu0 0
    %275 = vmatpush2.bf16.msra.mxu0 0
    %276 = vmatprep.subr.bf16.mxu0 0
    %277 = vmatpush2.bf16.msra.mxu0 0
    %278 = vmatprep.subr.bf16.mxu0 0
    %279 = vmatpush2.bf16.msra.mxu0 0
    %280 = vmatprep.subr.bf16.mxu0 0
    %281 = vmatpush2.bf16.msra.mxu0 0
    %282 = vmatprep.mubr.bf16.mxu0 0
    %283 = vmatmul.mubr.bf16.gmra.mxu0 %v248
    %v284 = vpop.f32.mrf.mxu0
    %v285 = vadd.f32 0.0, %v284
    %v286 = vpop.f32.mrf.mxu0
    %v287 = vpop.f32.mrf.mxu0
    %v288 = vadd.f32 0.0, %v287
    %v289 = vpop.f32.mrf.mxu0
    %290 = vdwg.mxu0
    %v291 = vpack.c.bf16 %v188, %v187
    %v293 = vunpack.c.l.b16 %v291
    %v294 = vunpack.c.h.b16 %v291
    %v295 = vpack.c.b16 %v293, %v293
    %v296 = vpack.c.b16 %v294, %v294
    %v297 = vpack.c.bf16 %v237, %v234
    %v299 = vunpack.c.l.b16 %v297
    %v300 = vunpack.c.h.b16 %v297
    %v301 = vpack.c.b16 %v299, %v299
    %v302 = vpack.c.b16 %v300, %v300
    %v303 = vpack.c.bf16 %v288, %v285
    %v305 = vunpack.c.l.b16 %v303
    %v306 = vunpack.c.h.b16 %v303
    %v307 = vpack.c.b16 %v305, %v305
    %v308 = vpack.c.b16 %v306, %v306
    %v309 = vld [vmem:[#allocation13] sm:$0xff]
    %v310 = vld [vmem:[#allocation13 + $0x8] sm:$0xff]
    %v311 = vld [vmem:[#allocation13 + $0x10] sm:$0xff]
    %v312 = vld [vmem:[#allocation13 + $0x18] sm:$0xff]
    %v313 = vpack.c.bf16 %v310, %v309
    %v314 = vpack.c.bf16 %v312, %v311
    %vm315 = vcmask 64512
    %v317 = vsel %vm315, %v295, 0
    %v320 = vsel %vm315, %v301, 0
    %322 = vmatprep.subr.bf16.mxu0 0
    %323 = vmatpush1.bf16.xpose.msra.mxu0 0
    %324 = vmatprep.subr.bf16.mxu0 0
    %325 = vmatpush1.bf16.xpose.msra.mxu0 0
    %326 = vmatprep.subr.bf16.mxu0 0
    %327 = vmatpush1.bf16.xpose.msra.mxu0 0
    %328 = vmatprep.subr.bf16.mxu0 0
    %329 = vmatpush1.bf16.xpose.msra.mxu0 0
    %330 = vmatprep.subr.bf16.mxu0 0
    %331 = vmatpush1.bf16.xpose.msra.mxu0 0
    %332 = vmatprep.subr.bf16.mxu0 0
    %333 = vmatpush1.bf16.xpose.msra.mxu0 0
    %334 = vmatprep.subr.bf16.mxu0 0
    %335 = vmatpush1.bf16.xpose.msra.mxu0 0
    %336 = vmatprep.subr.bf16.mxu0 0
    %337 = vmatpush1.bf16.xpose.msra.mxu0 %v320
    %338 = vmatprep.subr.bf16.mxu0 0
    %339 = vmatpush2.bf16.xpose.msra.mxu0 0
    %340 = vmatprep.subr.bf16.mxu0 0
    %341 = vmatpush2.bf16.xpose.msra.mxu0 0
    %342 = vmatprep.subr.bf16.mxu0 0
    %343 = vmatpush2.bf16.xpose.msra.mxu0 0
    %344 = vmatprep.subr.bf16.mxu0 0
    %345 = vmatpush2.bf16.xpose.msra.mxu0 0
    %346 = vmatprep.subr.bf16.mxu0 0
    %347 = vmatpush2.bf16.xpose.msra.mxu0 0
    %348 = vmatprep.subr.bf16.mxu0 0
    %349 = vmatpush2.bf16.xpose.msra.mxu0 0
    %350 = vmatprep.subr.bf16.mxu0 0
    %351 = vmatpush2.bf16.xpose.msra.mxu0 0
    %352 = vmatprep.subr.bf16.mxu0 0
    %353 = vmatpush2.bf16.xpose.msra.mxu0 0
    %354 = vmatprep.mubr.bf16.mxu0 0
    %355 = vmatmul.mubr.bf16.gmra.mxu0 %v317
    %v356 = vpop.f32.mrf.mxu0
    %v357 = vadd.f32 0.0, %v356
    %v358 = vpop.f32.mrf.mxu0
    %v359 = vpop.f32.mrf.mxu0
    %v360 = vpop.f32.mrf.mxu0
    %361 = vdwg.mxu0
    %v363 = vsel %vm315, %v296, 0
    %v366 = vsel %vm315, %v302, 0
    %368 = vmatprep.subr.bf16.mxu0 0
    %369 = vmatpush1.bf16.xpose.msra.mxu0 0
    %370 = vmatprep.subr.bf16.mxu0 0
    %371 = vmatpush1.bf16.xpose.msra.mxu0 0
    %372 = vmatprep.subr.bf16.mxu0 0
    %373 = vmatpush1.bf16.xpose.msra.mxu0 0
    %374 = vmatprep.subr.bf16.mxu0 0
    %375 = vmatpush1.bf16.xpose.msra.mxu0 0
    %376 = vmatprep.subr.bf16.mxu0 0
    %377 = vmatpush1.bf16.xpose.msra.mxu0 0
    %378 = vmatprep.subr.bf16.mxu0 0
    %379 = vmatpush1.bf16.xpose.msra.mxu0 0
    %380 = vmatprep.subr.bf16.mxu0 0
    %381 = vmatpush1.bf16.xpose.msra.mxu0 0
    %382 = vmatprep.subr.bf16.mxu0 0
    %383 = vmatpush1.bf16.xpose.msra.mxu0 %v366
    %384 = vmatprep.subr.bf16.mxu0 0
    %385 = vmatpush2.bf16.xpose.msra.mxu0 0
    %386 = vmatprep.subr.bf16.mxu0 0
    %387 = vmatpush2.bf16.xpose.msra.mxu0 0
    %388 = vmatprep.subr.bf16.mxu0 0
    %389 = vmatpush2.bf16.xpose.msra.mxu0 0
    %390 = vmatprep.subr.bf16.mxu0 0
    %391 = vmatpush2.bf16.xpose.msra.mxu0 0
    %392 = vmatprep.subr.bf16.mxu0 0
    %393 = vmatpush2.bf16.xpose.msra.mxu0 0
    %394 = vmatprep.subr.bf16.mxu0 0
    %395 = vmatpush2.bf16.xpose.msra.mxu0 0
    %396 = vmatprep.subr.bf16.mxu0 0
    %397 = vmatpush2.bf16.xpose.msra.mxu0 0
    %398 = vmatprep.subr.bf16.mxu0 0
    %399 = vmatpush2.bf16.xpose.msra.mxu0 0
    %400 = vmatprep.mubr.bf16.mxu0 0
    %401 = vmatmul.mubr.bf16.gmra.mxu0 %v363
    %v402 = vpop.f32.mrf.mxu0
    %v403 = vadd.f32 0.0, %v402
    %v404 = vpop.f32.mrf.mxu0
    %v405 = vpop.f32.mrf.mxu0
    %v406 = vpop.f32.mrf.mxu0
    %407 = vdwg.mxu0
    %v408 = vsel %vm315, %v357, -inf
    %409 = vmax.xlane.f32.xlu0 %v408
    %v410 = vpop.xlane.xlu0 %409
    %v411 = vsel %vm315, %v403, -inf
    %412 = vmax.xlane.f32.xlu0 %v411
    %v413 = vpop.xlane.xlu0 %412
    %v414 = vsub.f32 %v357, %v410
    %v415 = vsub.f32 %v403, %v413
    %v416 = vmul.f32 %v414, 1.442695
    %v417 = vpow.pop %v416
    %v418 = vmul.f32 %v415, 1.442695
    %v419 = vpow.pop %v418
    %v420 = vsel %vm315, %v417, 0.0
    %421 = vadd.xlane.f32.xlu0 %v420
    %v422 = vpop.xlane.xlu0 %421
    %v423 = vsel %vm315, %v419, 0.0
    %424 = vadd.xlane.f32.xlu0 %v423
    %v425 = vpop.xlane.xlu0 %424
    %v426 = vrcp.pop %v422
    %v427 = vrcp.pop %v425
    %v428 = vmul.f32 %v417, %v426
    %v429 = vmul.f32 %v419, %v427
    %v430 = vpack.c.bf16 %v428, %v428
    %v431 = vpack.c.bf16 %v429, %v429
    %v433 = vsel %vm315, %v430, 0
    %vm435 = vcmask 1043456
    %v437 = vsel %vm435, %v307, 0
    %439 = vmatprep.subr.bf16.mxu0 0
    %440 = vmatpush1.bf16.msra.mxu0 0
    %441 = vmatprep.subr.bf16.mxu0 0
    %442 = vmatpush1.bf16.msra.mxu0 0
    %443 = vmatprep.subr.bf16.mxu0 0
    %444 = vmatpush1.bf16.msra.mxu0 0
    %445 = vmatprep.subr.bf16.mxu0 0
    %446 = vmatpush1.bf16.msra.mxu0 0
    %447 = vmatprep.subr.bf16.mxu0 0
    %448 = vmatpush1.bf16.msra.mxu0 0
    %449 = vmatprep.subr.bf16.mxu0 0
    %450 = vmatpush1.bf16.msra.mxu0 0
    %451 = vmatprep.subr.bf16.mxu0 0
    %452 = vmatpush1.bf16.msra.mxu0 0
    %453 = vmatprep.subr.bf16.mxu0 0
    %454 = vmatpush1.bf16.msra.mxu0 %v437
    %455 = vmatprep.subr.bf16.mxu0 0
    %456 = vmatpush2.bf16.msra.mxu0 0
    %457 = vmatprep.subr.bf16.mxu0 0
    %458 = vmatpush2.bf16.msra.mxu0 0
    %459 = vmatprep.subr.bf16.mxu0 0
    %460 = vmatpush2.bf16.msra.mxu0 0
    %461 = vmatprep.subr.bf16.mxu0 0
    %462 = vmatpush2.bf16.msra.mxu0 0
    %463 = vmatprep.subr.bf16.mxu0 0
    %464 = vmatpush2.bf16.msra.mxu0 0
    %465 = vmatprep.subr.bf16.mxu0 0
    %466 = vmatpush2.bf16.msra.mxu0 0
    %467 = vmatprep.subr.bf16.mxu0 0
    %468 = vmatpush2.bf16.msra.mxu0 0
    %469 = vmatprep.subr.bf16.mxu0 0
    %470 = vmatpush2.bf16.msra.mxu0 0
    %471 = vmatprep.mubr.bf16.mxu0 0
    %472 = vmatmul.mubr.bf16.gmra.mxu0 %v433
    %v473 = vpop.f32.mrf.mxu0
    %v474 = vadd.f32 0.0, %v473
    %v475 = vpop.f32.mrf.mxu0
    %v476 = vpop.f32.mrf.mxu0
    %v477 = vpop.f32.mrf.mxu0
    %478 = vdwg.mxu0
    %v480 = vsel %vm315, %v431, 0
    %v483 = vsel %vm435, %v308, 0
    %485 = vmatprep.subr.bf16.mxu0 0
    %486 = vmatpush1.bf16.msra.mxu0 0
    %487 = vmatprep.subr.bf16.mxu0 0
    %488 = vmatpush1.bf16.msra.mxu0 0
    %489 = vmatprep.subr.bf16.mxu0 0
    %490 = vmatpush1.bf16.msra.mxu0 0
    %491 = vmatprep.subr.bf16.mxu0 0
    %492 = vmatpush1.bf16.msra.mxu0 0
    %493 = vmatprep.subr.bf16.mxu0 0
    %494 = vmatpush1.bf16.msra.mxu0 0
    %495 = vmatprep.subr.bf16.mxu0 0
    %496 = vmatpush1.bf16.msra.mxu0 0
    %497 = vmatprep.subr.bf16.mxu0 0
    %498 = vmatpush1.bf16.msra.mxu0 0
    %499 = vmatprep.subr.bf16.mxu0 0
    %500 = vmatpush1.bf16.msra.mxu0 %v483
    %501 = vmatprep.subr.bf16.mxu0 0
    %502 = vmatpush2.bf16.msra.mxu0 0
    %503 = vmatprep.subr.bf16.mxu0 0
    %504 = vmatpush2.bf16.msra.mxu0 0
    %505 = vmatprep.subr.bf16.mxu0 0
    %506 = vmatpush2.bf16.msra.mxu0 0
    %507 = vmatprep.subr.bf16.mxu0 0
    %508 = vmatpush2.bf16.msra.mxu0 0
    %509 = vmatprep.subr.bf16.mxu0 0
    %510 = vmatpush2.bf16.msra.mxu0 0
    %511 = vmatprep.subr.bf16.mxu0 0
    %512 = vmatpush2.bf16.msra.mxu0 0
    %513 = vmatprep.subr.bf16.mxu0 0
    %514 = vmatpush2.bf16.msra.mxu0 0
    %515 = vmatprep.subr.bf16.mxu0 0
    %516 = vmatpush2.bf16.msra.mxu0 0
    %517 = vmatprep.mubr.bf16.mxu0 0
    %518 = vmatmul.mubr.bf16.gmra.mxu0 %v480
    %v519 = vpop.f32.mrf.mxu0
    %v520 = vadd.f32 0.0, %v519
    %v521 = vpop.f32.mrf.mxu0
    %v522 = vpop.f32.mrf.mxu0
    %v523 = vpop.f32.mrf.mxu0
    %524 = vdwg.mxu0
    %v525 = vpack.c.bf16 %v474, %v474
    %v526 = vpack.c.bf16 %v520, %v520
    %527 = vrot.lane.b32.xlu0 %v295, 120
    %v528 = vpop.permute.xlu0 %527
    %529 = vrot.lane.b32.xlu0 %v301, 120
    %v530 = vpop.permute.xlu0 %529
    %v532 = vsel %vm315, %v528, 0
    %v535 = vsel %vm315, %v530, 0
    %537 = vmatprep.subr.bf16.mxu0 0
    %538 = vmatpush1.bf16.xpose.msra.mxu0 0
    %539 = vmatprep.subr.bf16.mxu0 0
    %540 = vmatpush1.bf16.xpose.msra.mxu0 0
    %541 = vmatprep.subr.bf16.mxu0 0
    %542 = vmatpush1.bf16.xpose.msra.mxu0 0
    %543 = vmatprep.subr.bf16.mxu0 0
    %544 = vmatpush1.bf16.xpose.msra.mxu0 0
    %545 = vmatprep.subr.bf16.mxu0 0
    %546 = vmatpush1.bf16.xpose.msra.mxu0 0
    %547 = vmatprep.subr.bf16.mxu0 0
    %548 = vmatpush1.bf16.xpose.msra.mxu0 0
    %549 = vmatprep.subr.bf16.mxu0 0
    %550 = vmatpush1.bf16.xpose.msra.mxu0 0
    %551 = vmatprep.subr.bf16.mxu0 0
    %552 = vmatpush1.bf16.xpose.msra.mxu0 %v535
    %553 = vmatprep.subr.bf16.mxu0 0
    %554 = vmatpush2.bf16.xpose.msra.mxu0 0
    %555 = vmatprep.subr.bf16.mxu0 0
    %556 = vmatpush2.bf16.xpose.msra.mxu0 0
    %557 = vmatprep.subr.bf16.mxu0 0
    %558 = vmatpush2.bf16.xpose.msra.mxu0 0
    %559 = vmatprep.subr.bf16.mxu0 0
    %560 = vmatpush2.bf16.xpose.msra.mxu0 0
    %561 = vmatprep.subr.bf16.mxu0 0
    %562 = vmatpush2.bf16.xpose.msra.mxu0 0
    %563 = vmatprep.subr.bf16.mxu0 0
    %564 = vmatpush2.bf16.xpose.msra.mxu0 0
    %565 = vmatprep.subr.bf16.mxu0 0
    %566 = vmatpush2.bf16.xpose.msra.mxu0 0
    %567 = vmatprep.subr.bf16.mxu0 0
    %568 = vmatpush2.bf16.xpose.msra.mxu0 0
    %569 = vmatprep.mubr.bf16.mxu0 0
    %570 = vmatmul.mubr.bf16.gmra.mxu0 %v532
    %v571 = vpop.f32.mrf.mxu0
    %v572 = vadd.f32 0.0, %v571
    %v573 = vpop.f32.mrf.mxu0
    %v574 = vpop.f32.mrf.mxu0
    %v575 = vpop.f32.mrf.mxu0
    %576 = vdwg.mxu0
    %577 = vrot.lane.b32.xlu0 %v296, 120
    %v578 = vpop.permute.xlu0 %577
    %579 = vrot.lane.b32.xlu0 %v302, 120
    %v580 = vpop.permute.xlu0 %579
    %v582 = vsel %vm315, %v578, 0
    %v585 = vsel %vm315, %v580, 0
    %587 = vmatprep.subr.bf16.mxu0 0
    %588 = vmatpush1.bf16.xpose.msra.mxu0 0
    %589 = vmatprep.subr.bf16.mxu0 0
    %590 = vmatpush1.bf16.xpose.msra.mxu0 0
    %591 = vmatprep.subr.bf16.mxu0 0
    %592 = vmatpush1.bf16.xpose.msra.mxu0 0
    %593 = vmatprep.subr.bf16.mxu0 0
    %594 = vmatpush1.bf16.xpose.msra.mxu0 0
    %595 = vmatprep.subr.bf16.mxu0 0
    %596 = vmatpush1.bf16.xpose.msra.mxu0 0
    %597 = vmatprep.subr.bf16.mxu0 0
    %598 = vmatpush1.bf16.xpose.msra.mxu0 0
    %599 = vmatprep.subr.bf16.mxu0 0
    %600 = vmatpush1.bf16.xpose.msra.mxu0 0
    %601 = vmatprep.subr.bf16.mxu0 0
    %602 = vmatpush1.bf16.xpose.msra.mxu0 %v585
    %603 = vmatprep.subr.bf16.mxu0 0
    %604 = vmatpush2.bf16.xpose.msra.mxu0 0
    %605 = vmatprep.subr.bf16.mxu0 0
    %606 = vmatpush2.bf16.xpose.msra.mxu0 0
    %607 = vmatprep.subr.bf16.mxu0 0
    %608 = vmatpush2.bf16.xpose.msra.mxu0 0
    %609 = vmatprep.subr.bf16.mxu0 0
    %610 = vmatpush2.bf16.xpose.msra.mxu0 0
    %611 = vmatprep.subr.bf16.mxu0 0
    %612 = vmatpush2.bf16.xpose.msra.mxu0 0
    %613 = vmatprep.subr.bf16.mxu0 0
    %614 = vmatpush2.bf16.xpose.msra.mxu0 0
    %615 = vmatprep.subr.bf16.mxu0 0
    %616 = vmatpush2.bf16.xpose.msra.mxu0 0
    %617 = vmatprep.subr.bf16.mxu0 0
    %618 = vmatpush2.bf16.xpose.msra.mxu0 0
    %619 = vmatprep.mubr.bf16.mxu0 0
    %620 = vmatmul.mubr.bf16.gmra.mxu0 %v582
    %v621 = vpop.f32.mrf.mxu0
    %v622 = vadd.f32 0.0, %v621
    %v623 = vpop.f32.mrf.mxu0
    %v624 = vpop.f32.mrf.mxu0
    %v625 = vpop.f32.mrf.mxu0
    %626 = vdwg.mxu0
    %v627 = vsel %vm315, %v572, -inf
    %628 = vmax.xlane.f32.xlu0 %v627
    %v629 = vpop.xlane.xlu0 %628
    %v630 = vsel %vm315, %v622, -inf
    %631 = vmax.xlane.f32.xlu0 %v630
    %v632 = vpop.xlane.xlu0 %631
    %v633 = vsub.f32 %v572, %v629
    %v634 = vsub.f32 %v622, %v632
    %v635 = vmul.f32 %v633, 1.442695
    %v636 = vpow.pop %v635
    %v637 = vmul.f32 %v634, 1.442695
    %v638 = vpow.pop %v637
    %v639 = vsel %vm315, %v636, 0.0
    %640 = vadd.xlane.f32.xlu0 %v639
    %v641 = vpop.xlane.xlu0 %640
    %v642 = vsel %vm315, %v638, 0.0
    %643 = vadd.xlane.f32.xlu0 %v642
    %v644 = vpop.xlane.xlu0 %643
    %v645 = vrcp.pop %v641
    %v646 = vrcp.pop %v644
    %v647 = vmul.f32 %v636, %v645
    %v648 = vmul.f32 %v638, %v646
    %v649 = vpack.c.bf16 %v647, %v647
    %v650 = vpack.c.bf16 %v648, %v648
    %651 = vrot.lane.b32.xlu0 %v307, 120
    %v652 = vpop.permute.xlu0 %651
    %v654 = vsel %vm315, %v649, 0
    %v657 = vsel %vm435, %v652, 0
    %659 = vmatprep.subr.bf16.mxu0 0
    %660 = vmatpush1.bf16.msra.mxu0 0
    %661 = vmatprep.subr.bf16.mxu0 0
    %662 = vmatpush1.bf16.msra.mxu0 0
    %663 = vmatprep.subr.bf16.mxu0 0
    %664 = vmatpush1.bf16.msra.mxu0 0
    %665 = vmatprep.subr.bf16.mxu0 0
    %666 = vmatpush1.bf16.msra.mxu0 0
    %667 = vmatprep.subr.bf16.mxu0 0
    %668 = vmatpush1.bf16.msra.mxu0 0
    %669 = vmatprep.subr.bf16.mxu0 0
    %670 = vmatpush1.bf16.msra.mxu0 0
    %671 = vmatprep.subr.bf16.mxu0 0
    %672 = vmatpush1.bf16.msra.mxu0 0
    %673 = vmatprep.subr.bf16.mxu0 0
    %674 = vmatpush1.bf16.msra.mxu0 %v657
    %675 = vmatprep.subr.bf16.mxu0 0
    %676 = vmatpush2.bf16.msra.mxu0 0
    %677 = vmatprep.subr.bf16.mxu0 0
    %678 = vmatpush2.bf16.msra.mxu0 0
    %679 = vmatprep.subr.bf16.mxu0 0
    %680 = vmatpush2.bf16.msra.mxu0 0
    %681 = vmatprep.subr.bf16.mxu0 0
    %682 = vmatpush2.bf16.msra.mxu0 0
    %683 = vmatprep.subr.bf16.mxu0 0
    %684 = vmatpush2.bf16.msra.mxu0 0
    %685 = vmatprep.subr.bf16.mxu0 0
    %686 = vmatpush2.bf16.msra.mxu0 0
    %687 = vmatprep.subr.bf16.mxu0 0
    %688 = vmatpush2.bf16.msra.mxu0 0
    %689 = vmatprep.subr.bf16.mxu0 0
    %690 = vmatpush2.bf16.msra.mxu0 0
    %691 = vmatprep.mubr.bf16.mxu0 0
    %692 = vmatmul.mubr.bf16.gmra.mxu0 %v654
    %v693 = vpop.f32.mrf.mxu0
    %v694 = vadd.f32 0.0, %v693
    %v695 = vpop.f32.mrf.mxu0
    %v696 = vpop.f32.mrf.mxu0
    %v697 = vpop.f32.mrf.mxu0
    %698 = vdwg.mxu0
    %699 = vrot.lane.b32.xlu0 %v308, 120
    %v700 = vpop.permute.xlu0 %699
    %v702 = vsel %vm315, %v650, 0
    %v705 = vsel %vm435, %v700, 0
    %707 = vmatprep.subr.bf16.mxu0 0
    %708 = vmatpush1.bf16.msra.mxu0 0
    %709 = vmatprep.subr.bf16.mxu0 0
    %710 = vmatpush1.bf16.msra.mxu0 0
    %711 = vmatprep.subr.bf16.mxu0 0
    %712 = vmatpush1.bf16.msra.mxu0 0
    %713 = vmatprep.subr.bf16.mxu0 0
    %714 = vmatpush1.bf16.msra.mxu0 0
    %715 = vmatprep.subr.bf16.mxu0 0
    %716 = vmatpush1.bf16.msra.mxu0 0
    %717 = vmatprep.subr.bf16.mxu0 0
    %718 = vmatpush1.bf16.msra.mxu0 0
    %719 = vmatprep.subr.bf16.mxu0 0
    %720 = vmatpush1.bf16.msra.mxu0 0
    %721 = vmatprep.subr.bf16.mxu0 0
    %722 = vmatpush1.bf16.msra.mxu0 %v705
    %723 = vmatprep.subr.bf16.mxu0 0
    %724 = vmatpush2.bf16.msra.mxu0 0
    %725 = vmatprep.subr.bf16.mxu0 0
    %726 = vmatpush2.bf16.msra.mxu0 0
    %727 = vmatprep.subr.bf16.mxu0 0
    %728 = vmatpush2.bf16.msra.mxu0 0
    %729 = vmatprep.subr.bf16.mxu0 0
    %730 = vmatpush2.bf16.msra.mxu0 0
    %731 = vmatprep.subr.bf16.mxu0 0
    %732 = vmatpush2.bf16.msra.mxu0 0
    %733 = vmatprep.subr.bf16.mxu0 0
    %734 = vmatpush2.bf16.msra.mxu0 0
    %735 = vmatprep.subr.bf16.mxu0 0
    %736 = vmatpush2.bf16.msra.mxu0 0
    %737 = vmatprep.subr.bf16.mxu0 0
    %738 = vmatpush2.bf16.msra.mxu0 0
    %739 = vmatprep.mubr.bf16.mxu0 0
    %740 = vmatmul.mubr.bf16.gmra.mxu0 %v702
    %v741 = vpop.f32.mrf.mxu0
    %v742 = vadd.f32 0.0, %v741
    %v743 = vpop.f32.mrf.mxu0
    %v744 = vpop.f32.mrf.mxu0
    %v745 = vpop.f32.mrf.mxu0
    %746 = vdwg.mxu0
    %v747 = vpack.c.bf16 %v694, %v694
    %v748 = vpack.c.bf16 %v742, %v742
    %v751 = vunpack.c.l.b16 %v747
    %v752 = vunpack.c.l.b16 %v748
    %v753 = vpack.c.b16 %v752, %v751
    %v755 = vrot.slane %v313, 4
    %v757 = vsel %vm315, %v753, 0
    %v760 = vsel %vm435, %v755, 0
    %762 = vmatprep.subr.bf16.mxu0 0
    %763 = vmatpush1.bf16.msra.mxu0 0
    %764 = vmatprep.subr.bf16.mxu0 0
    %765 = vmatpush1.bf16.msra.mxu0 0
    %766 = vmatprep.subr.bf16.mxu0 0
    %767 = vmatpush1.bf16.msra.mxu0 0
    %768 = vmatprep.subr.bf16.mxu0 0
    %769 = vmatpush1.bf16.msra.mxu0 0
    %770 = vmatprep.subr.bf16.mxu0 0
    %771 = vmatpush1.bf16.msra.mxu0 0
    %772 = vmatprep.subr.bf16.mxu0 0
    %773 = vmatpush1.bf16.msra.mxu0 0
    %774 = vmatprep.subr.bf16.mxu0 0
    %775 = vmatpush1.bf16.msra.mxu0 0
    %776 = vmatprep.subr.bf16.mxu0 0
    %777 = vmatpush1.bf16.msra.mxu0 %v760
    %778 = vmatprep.subr.bf16.mxu0 0
    %779 = vmatpush2.bf16.msra.mxu0 0
    %780 = vmatprep.subr.bf16.mxu0 0
    %781 = vmatpush2.bf16.msra.mxu0 0
    %782 = vmatprep.subr.bf16.mxu0 0
    %783 = vmatpush2.bf16.msra.mxu0 0
    %784 = vmatprep.subr.bf16.mxu0 0
    %785 = vmatpush2.bf16.msra.mxu0 0
    %786 = vmatprep.subr.bf16.mxu0 0
    %787 = vmatpush2.bf16.msra.mxu0 0
    %788 = vmatprep.subr.bf16.mxu0 0
    %789 = vmatpush2.bf16.msra.mxu0 0
    %790 = vmatprep.subr.bf16.mxu0 0
    %791 = vmatpush2.bf16.msra.mxu0 0
    %792 = vmatprep.subr.bf16.mxu0 0
    %793 = vmatpush2.bf16.msra.mxu0 0
    %794 = vmatprep.mubr.bf16.mxu0 0
    %795 = vmatmul.mubr.bf16.gmra.mxu0 %v757
    %v796 = vpop.f32.mrf.mxu0
    %v797 = vadd.f32 0.0, %v796
    %v798 = vpop.f32.mrf.mxu0
    %v799 = vpop.f32.mrf.mxu0
    %v800 = vadd.f32 0.0, %v799
    %v801 = vpop.f32.mrf.mxu0
    %802 = vdwg.mxu0
    %v805 = vunpack.c.l.b16 %v525
    %v806 = vunpack.c.l.b16 %v526
    %v807 = vpack.c.b16 %v806, %v805
    %v809 = vsel %vm315, %v807, 0
    %v812 = vsel %vm435, %v313, 0
    %814 = vmatprep.subr.bf16.mxu0 0
    %815 = vmatpush1.bf16.msra.mxu0 0
    %816 = vmatprep.subr.bf16.mxu0 0
    %817 = vmatpush1.bf16.msra.mxu0 0
    %818 = vmatprep.subr.bf16.mxu0 0
    %819 = vmatpush1.bf16.msra.mxu0 0
    %820 = vmatprep.subr.bf16.mxu0 0
    %821 = vmatpush1.bf16.msra.mxu0 0
    %822 = vmatprep.subr.bf16.mxu0 0
    %823 = vmatpush1.bf16.msra.mxu0 0
    %824 = vmatprep.subr.bf16.mxu0 0
    %825 = vmatpush1.bf16.msra.mxu0 0
    %826 = vmatprep.subr.bf16.mxu0 0
    %827 = vmatpush1.bf16.msra.mxu0 0
    %828 = vmatprep.subr.bf16.mxu0 0
    %829 = vmatpush1.bf16.msra.mxu0 %v812
    %830 = vmatprep.subr.bf16.mxu0 0
    %831 = vmatpush2.bf16.msra.mxu0 0
    %832 = vmatprep.subr.bf16.mxu0 0
    %833 = vmatpush2.bf16.msra.mxu0 0
    %834 = vmatprep.subr.bf16.mxu0 0
    %835 = vmatpush2.bf16.msra.mxu0 0
    %836 = vmatprep.subr.bf16.mxu0 0
    %837 = vmatpush2.bf16.msra.mxu0 0
    %838 = vmatprep.subr.bf16.mxu0 0
    %839 = vmatpush2.bf16.msra.mxu0 0
    %840 = vmatprep.subr.bf16.mxu0 0
    %841 = vmatpush2.bf16.msra.mxu0 0
    %842 = vmatprep.subr.bf16.mxu0 0
    %843 = vmatpush2.bf16.msra.mxu0 0
    %844 = vmatprep.subr.bf16.mxu0 0
    %845 = vmatpush2.bf16.msra.mxu0 0
    %846 = vmatprep.mubr.bf16.mxu0 0
    %847 = vmatmul.mubr.bf16.gmra.mxu0 %v809
    %v848 = vpop.f32.mrf.mxu0
    %v849 = vadd.f32 %v797, %v848
    %v850 = vpop.f32.mrf.mxu0
    %v851 = vpop.f32.mrf.mxu0
    %v852 = vadd.f32 %v800, %v851
    %v853 = vpop.f32.mrf.mxu0
    %854 = vdwg.mxu0
    %855 = vrot.lane.b32.xlu0 %v295, 112
    %v856 = vpop.permute.xlu0 %855
    %857 = vrot.lane.b32.xlu0 %v301, 112
    %v858 = vpop.permute.xlu0 %857
    %v860 = vsel %vm315, %v856, 0
    %v863 = vsel %vm315, %v858, 0
    %865 = vmatprep.subr.bf16.mxu0 0
    %866 = vmatpush1.bf16.xpose.msra.mxu0 0
    %867 = vmatprep.subr.bf16.mxu0 0
    %868 = vmatpush1.bf16.xpose.msra.mxu0 0
    %869 = vmatprep.subr.bf16.mxu0 0
    %870 = vmatpush1.bf16.xpose.msra.mxu0 0
    %871 = vmatprep.subr.bf16.mxu0 0
    %872 = vmatpush1.bf16.xpose.msra.mxu0 0
    %873 = vmatprep.subr.bf16.mxu0 0
    %874 = vmatpush1.bf16.xpose.msra.mxu0 0
    %875 = vmatprep.subr.bf16.mxu0 0
    %876 = vmatpush1.bf16.xpose.msra.mxu0 0
    %877 = vmatprep.subr.bf16.mxu0 0
    %878 = vmatpush1.bf16.xpose.msra.mxu0 0
    %879 = vmatprep.subr.bf16.mxu0 0
    %880 = vmatpush1.bf16.xpose.msra.mxu0 %v863
    %881 = vmatprep.subr.bf16.mxu0 0
    %882 = vmatpush2.bf16.xpose.msra.mxu0 0
    %883 = vmatprep.subr.bf16.mxu0 0
    %884 = vmatpush2.bf16.xpose.msra.mxu0 0
    %885 = vmatprep.subr.bf16.mxu0 0
    %886 = vmatpush2.bf16.xpose.msra.mxu0 0
    %887 = vmatprep.subr.bf16.mxu0 0
    %888 = vmatpush2.bf16.xpose.msra.mxu0 0
    %889 = vmatprep.subr.bf16.mxu0 0
    %890 = vmatpush2.bf16.xpose.msra.mxu0 0
    %891 = vmatprep.subr.bf16.mxu0 0
    %892 = vmatpush2.bf16.xpose.msra.mxu0 0
    %893 = vmatprep.subr.bf16.mxu0 0
    %894 = vmatpush2.bf16.xpose.msra.mxu0 0
    %895 = vmatprep.subr.bf16.mxu0 0
    %896 = vmatpush2.bf16.xpose.msra.mxu0 0
    %897 = vmatprep.mubr.bf16.mxu0 0
    %898 = vmatmul.mubr.bf16.gmra.mxu0 %v860
    %v899 = vpop.f32.mrf.mxu0
    %v900 = vadd.f32 0.0, %v899
    %v901 = vpop.f32.mrf.mxu0
    %v902 = vpop.f32.mrf.mxu0
    %v903 = vpop.f32.mrf.mxu0
    %904 = vdwg.mxu0
    %905 = vrot.lane.b32.xlu0 %v296, 112
    %v906 = vpop.permute.xlu0 %905
    %907 = vrot.lane.b32.xlu0 %v302, 112
    %v908 = vpop.permute.xlu0 %907
    %v910 = vsel %vm315, %v906, 0
    %v913 = vsel %vm315, %v908, 0
    %915 = vmatprep.subr.bf16.mxu0 0
    %916 = vmatpush1.bf16.xpose.msra.mxu0 0
    %917 = vmatprep.subr.bf16.mxu0 0
    %918 = vmatpush1.bf16.xpose.msra.mxu0 0
    %919 = vmatprep.subr.bf16.mxu0 0
    %920 = vmatpush1.bf16.xpose.msra.mxu0 0
    %921 = vmatprep.subr.bf16.mxu0 0
    %922 = vmatpush1.bf16.xpose.msra.mxu0 0
    %923 = vmatprep.subr.bf16.mxu0 0
    %924 = vmatpush1.bf16.xpose.msra.mxu0 0
    %925 = vmatprep.subr.bf16.mxu0 0
    %926 = vmatpush1.bf16.xpose.msra.mxu0 0
    %927 = vmatprep.subr.bf16.mxu0 0
    %928 = vmatpush1.bf16.xpose.msra.mxu0 0
    %929 = vmatprep.subr.bf16.mxu0 0
    %930 = vmatpush1.bf16.xpose.msra.mxu0 %v913
    %931 = vmatprep.subr.bf16.mxu0 0
    %932 = vmatpush2.bf16.xpose.msra.mxu0 0
    %933 = vmatprep.subr.bf16.mxu0 0
    %934 = vmatpush2.bf16.xpose.msra.mxu0 0
    %935 = vmatprep.subr.bf16.mxu0 0
    %936 = vmatpush2.bf16.xpose.msra.mxu0 0
    %937 = vmatprep.subr.bf16.mxu0 0
    %938 = vmatpush2.bf16.xpose.msra.mxu0 0
    %939 = vmatprep.subr.bf16.mxu0 0
    %940 = vmatpush2.bf16.xpose.msra.mxu0 0
    %941 = vmatprep.subr.bf16.mxu0 0
    %942 = vmatpush2.bf16.xpose.msra.mxu0 0
    %943 = vmatprep.subr.bf16.mxu0 0
    %944 = vmatpush2.bf16.xpose.msra.mxu0 0
    %945 = vmatprep.subr.bf16.mxu0 0
    %946 = vmatpush2.bf16.xpose.msra.mxu0 0
    %947 = vmatprep.mubr.bf16.mxu0 0
    %948 = vmatmul.mubr.bf16.gmra.mxu0 %v910
    %v949 = vpop.f32.mrf.mxu0
    %v950 = vadd.f32 0.0, %v949
    %v951 = vpop.f32.mrf.mxu0
    %v952 = vpop.f32.mrf.mxu0
    %v953 = vpop.f32.mrf.mxu0
    %954 = vdwg.mxu0
    %v955 = vsel %vm315, %v900, -inf
    %956 = vmax.xlane.f32.xlu0 %v955
    %v957 = vpop.xlane.xlu0 %956
    %v958 = vsel %vm315, %v950, -inf
    %959 = vmax.xlane.f32.xlu0 %v958
    %v960 = vpop.xlane.xlu0 %959
    %v961 = vsub.f32 %v900, %v957
    %v962 = vsub.f32 %v950, %v960
    %v963 = vmul.f32 %v961, 1.442695
    %v964 = vpow.pop %v963
    %v965 = vmul.f32 %v962, 1.442695
    %v966 = vpow.pop %v965
    %v967 = vsel %vm315, %v964, 0.0
    %968 = vadd.xlane.f32.xlu0 %v967
    %v969 = vpop.xlane.xlu0 %968
    %v970 = vsel %vm315, %v966, 0.0
    %971 = vadd.xlane.f32.xlu0 %v970
    %v972 = vpop.xlane.xlu0 %971
    %v973 = vrcp.pop %v969
    %v974 = vrcp.pop %v972
    %v975 = vmul.f32 %v964, %v973
    %v976 = vmul.f32 %v966, %v974
    %v977 = vpack.c.bf16 %v975, %v975
    %v978 = vpack.c.bf16 %v976, %v976
    %979 = vrot.lane.b32.xlu0 %v307, 112
    %v980 = vpop.permute.xlu0 %979
    %v982 = vsel %vm315, %v977, 0
    %v985 = vsel %vm435, %v980, 0
    %987 = vmatprep.subr.bf16.mxu0 0
    %988 = vmatpush1.bf16.msra.mxu0 0
    %989 = vmatprep.subr.bf16.mxu0 0
    %990 = vmatpush1.bf16.msra.mxu0 0
    %991 = vmatprep.subr.bf16.mxu0 0
    %992 = vmatpush1.bf16.msra.mxu0 0
    %993 = vmatprep.subr.bf16.mxu0 0
    %994 = vmatpush1.bf16.msra.mxu0 0
    %995 = vmatprep.subr.bf16.mxu0 0
    %996 = vmatpush1.bf16.msra.mxu0 0
    %997 = vmatprep.subr.bf16.mxu0 0
    %998 = vmatpush1.bf16.msra.mxu0 0
    %999 = vmatprep.subr.bf16.mxu0 0
    %1000 = vmatpush1.bf16.msra.mxu0 0
    %1001 = vmatprep.subr.bf16.mxu0 0
    %1002 = vmatpush1.bf16.msra.mxu0 %v985
    %1003 = vmatprep.subr.bf16.mxu0 0
    %1004 = vmatpush2.bf16.msra.mxu0 0
    %1005 = vmatprep.subr.bf16.mxu0 0
    %1006 = vmatpush2.bf16.msra.mxu0 0
    %1007 = vmatprep.subr.bf16.mxu0 0
    %1008 = vmatpush2.bf16.msra.mxu0 0
    %1009 = vmatprep.subr.bf16.mxu0 0
    %1010 = vmatpush2.bf16.msra.mxu0 0
    %1011 = vmatprep.subr.bf16.mxu0 0
    %1012 = vmatpush2.bf16.msra.mxu0 0
    %1013 = vmatprep.subr.bf16.mxu0 0
    %1014 = vmatpush2.bf16.msra.mxu0 0
    %1015 = vmatprep.subr.bf16.mxu0 0
    %1016 = vmatpush2.bf16.msra.mxu0 0
    %1017 = vmatprep.subr.bf16.mxu0 0
    %1018 = vmatpush2.bf16.msra.mxu0 0
    %1019 = vmatprep.mubr.bf16.mxu0 0
    %1020 = vmatmul.mubr.bf16.gmra.mxu0 %v982
    %v1021 = vpop.f32.mrf.mxu0
    %v1022 = vadd.f32 0.0, %v1021
    %v1023 = vpop.f32.mrf.mxu0
    %v1024 = vpop.f32.mrf.mxu0
    %v1025 = vpop.f32.mrf.mxu0
    %1026 = vdwg.mxu0
    %1027 = vrot.lane.b32.xlu0 %v308, 112
    %v1028 = vpop.permute.xlu0 %1027
    %v1030 = vsel %vm315, %v978, 0
    %v1033 = vsel %vm435, %v1028, 0
    %1035 = vmatprep.subr.bf16.mxu0 0
    %1036 = vmatpush1.bf16.msra.mxu0 0
    %1037 = vmatprep.subr.bf16.mxu0 0
    %1038 = vmatpush1.bf16.msra.mxu0 0
    %1039 = vmatprep.subr.bf16.mxu0 0
    %1040 = vmatpush1.bf16.msra.mxu0 0
    %1041 = vmatprep.subr.bf16.mxu0 0
    %1042 = vmatpush1.bf16.msra.mxu0 0
    %1043 = vmatprep.subr.bf16.mxu0 0
    %1044 = vmatpush1.bf16.msra.mxu0 0
    %1045 = vmatprep.subr.bf16.mxu0 0
    %1046 = vmatpush1.bf16.msra.mxu0 0
    %1047 = vmatprep.subr.bf16.mxu0 0
    %1048 = vmatpush1.bf16.msra.mxu0 0
    %1049 = vmatprep.subr.bf16.mxu0 0
    %1050 = vmatpush1.bf16.msra.mxu0 %v1033
    %1051 = vmatprep.subr.bf16.mxu0 0
    %1052 = vmatpush2.bf16.msra.mxu0 0
    %1053 = vmatprep.subr.bf16.mxu0 0
    %1054 = vmatpush2.bf16.msra.mxu0 0
    %1055 = vmatprep.subr.bf16.mxu0 0
    %1056 = vmatpush2.bf16.msra.mxu0 0
    %1057 = vmatprep.subr.bf16.mxu0 0
    %1058 = vmatpush2.bf16.msra.mxu0 0
    %1059 = vmatprep.subr.bf16.mxu0 0
    %1060 = vmatpush2.bf16.msra.mxu0 0
    %1061 = vmatprep.subr.bf16.mxu0 0
    %1062 = vmatpush2.bf16.msra.mxu0 0
    %1063 = vmatprep.subr.bf16.mxu0 0
    %1064 = vmatpush2.bf16.msra.mxu0 0
    %1065 = vmatprep.subr.bf16.mxu0 0
    %1066 = vmatpush2.bf16.msra.mxu0 0
    %1067 = vmatprep.mubr.bf16.mxu0 0
    %1068 = vmatmul.mubr.bf16.gmra.mxu0 %v1030
    %v1069 = vpop.f32.mrf.mxu0
    %v1070 = vadd.f32 0.0, %v1069
    %v1071 = vpop.f32.mrf.mxu0
    %v1072 = vpop.f32.mrf.mxu0
    %v1073 = vpop.f32.mrf.mxu0
    %1074 = vdwg.mxu0
    %v1075 = vpack.c.bf16 %v1022, %v1022
    %v1076 = vpack.c.bf16 %v1070, %v1070
    %v1079 = vunpack.c.l.b16 %v1075
    %v1080 = vunpack.c.l.b16 %v1076
    %v1081 = vpack.c.b16 %v1080, %v1079
    %v1083 = vsel %vm315, %v1081, 0
    %v1086 = vsel %vm435, %v314, 0
    %1088 = vmatprep.subr.bf16.mxu0 0
    %1089 = vmatpush1.bf16.msra.mxu0 0
    %1090 = vmatprep.subr.bf16.mxu0 0
    %1091 = vmatpush1.bf16.msra.mxu0 0
    %1092 = vmatprep.subr.bf16.mxu0 0
    %1093 = vmatpush1.bf16.msra.mxu0 0
    %1094 = vmatprep.subr.bf16.mxu0 0
    %1095 = vmatpush1.bf16.msra.mxu0 0
    %1096 = vmatprep.subr.bf16.mxu0 0
    %1097 = vmatpush1.bf16.msra.mxu0 0
    %1098 = vmatprep.subr.bf16.mxu0 0
    %1099 = vmatpush1.bf16.msra.mxu0 0
    %1100 = vmatprep.subr.bf16.mxu0 0
    %1101 = vmatpush1.bf16.msra.mxu0 0
    %1102 = vmatprep.subr.bf16.mxu0 0
    %1103 = vmatpush1.bf16.msra.mxu0 %v1086
    %1104 = vmatprep.subr.bf16.mxu0 0
    %1105 = vmatpush2.bf16.msra.mxu0 0
    %1106 = vmatprep.subr.bf16.mxu0 0
    %1107 = vmatpush2.bf16.msra.mxu0 0
    %1108 = vmatprep.subr.bf16.mxu0 0
    %1109 = vmatpush2.bf16.msra.mxu0 0
    %1110 = vmatprep.subr.bf16.mxu0 0
    %1111 = vmatpush2.bf16.msra.mxu0 0
    %1112 = vmatprep.subr.bf16.mxu0 0
    %1113 = vmatpush2.bf16.msra.mxu0 0
    %1114 = vmatprep.subr.bf16.mxu0 0
    %1115 = vmatpush2.bf16.msra.mxu0 0
    %1116 = vmatprep.subr.bf16.mxu0 0
    %1117 = vmatpush2.bf16.msra.mxu0 0
    %1118 = vmatprep.subr.bf16.mxu0 0
    %1119 = vmatpush2.bf16.msra.mxu0 0
    %1120 = vmatprep.mubr.bf16.mxu0 0
    %1121 = vmatmul.mubr.bf16.gmra.mxu0 %v1083
    %v1122 = vpop.f32.mrf.mxu0
    %v1123 = vadd.f32 0.0, %v1122
    %v1124 = vpop.f32.mrf.mxu0
    %v1125 = vpop.f32.mrf.mxu0
    %v1126 = vadd.f32 0.0, %v1125
    %v1127 = vpop.f32.mrf.mxu0
    %1128 = vdwg.mxu0
    %v1129 = vadd.f32 %v849, %v1123
    %v1130 = vadd.f32 %v852, %v1126
    %1131 = vrot.lane.b32.xlu0 %v295, 104
    %v1132 = vpop.permute.xlu0 %1131
    %1133 = vrot.lane.b32.xlu0 %v301, 104
    %v1134 = vpop.permute.xlu0 %1133
    %v1136 = vsel %vm315, %v1132, 0
    %v1139 = vsel %vm315, %v1134, 0
    %1141 = vmatprep.subr.bf16.mxu0 0
    %1142 = vmatpush1.bf16.xpose.msra.mxu0 0
    %1143 = vmatprep.subr.bf16.mxu0 0
    %1144 = vmatpush1.bf16.xpose.msra.mxu0 0
    %1145 = vmatprep.subr.bf16.mxu0 0
    %1146 = vmatpush1.bf16.xpose.msra.mxu0 0
    %1147 = vmatprep.subr.bf16.mxu0 0
    %1148 = vmatpush1.bf16.xpose.msra.mxu0 0
    %1149 = vmatprep.subr.bf16.mxu0 0
    %1150 = vmatpush1.bf16.xpose.msra.mxu0 0
    %1151 = vmatprep.subr.bf16.mxu0 0
    %1152 = vmatpush1.bf16.xpose.msra.mxu0 0
    %1153 = vmatprep.subr.bf16.mxu0 0
    %1154 = vmatpush1.bf16.xpose.msra.mxu0 0
    %1155 = vmatprep.subr.bf16.mxu0 0
    %1156 = vmatpush1.bf16.xpose.msra.mxu0 %v1139
    %1157 = vmatprep.subr.bf16.mxu0 0
    %1158 = vmatpush2.bf16.xpose.msra.mxu0 0
    %1159 = vmatprep.subr.bf16.mxu0 0
    %1160 = vmatpush2.bf16.xpose.msra.mxu0 0
    %1161 = vmatprep.subr.bf16.mxu0 0
    %1162 = vmatpush2.bf16.xpose.msra.mxu0 0
    %1163 = vmatprep.subr.bf16.mxu0 0
    %1164 = vmatpush2.bf16.xpose.msra.mxu0 0
    %1165 = vmatprep.subr.bf16.mxu0 0
    %1166 = vmatpush2.bf16.xpose.msra.mxu0 0
    %1167 = vmatprep.subr.bf16.mxu0 0
    %1168 = vmatpush2.bf16.xpose.msra.mxu0 0
    %1169 = vmatprep.subr.bf16.mxu0 0
    %1170 = vmatpush2.bf16.xpose.msra.mxu0 0
    %1171 = vmatprep.subr.bf16.mxu0 0
    %1172 = vmatpush2.bf16.xpose.msra.mxu0 0
    %1173 = vmatprep.mubr.bf16.mxu0 0
    %1174 = vmatmul.mubr.bf16.gmra.mxu0 %v1136
    %v1175 = vpop.f32.mrf.mxu0
    %v1176 = vadd.f32 0.0, %v1175
    %v1177 = vpop.f32.mrf.mxu0
    %v1178 = vpop.f32.mrf.mxu0
    %v1179 = vpop.f32.mrf.mxu0
    %1180 = vdwg.mxu0
    %1181 = vrot.lane.b32.xlu0 %v296, 104
    %v1182 = vpop.permute.xlu0 %1181
    %1183 = vrot.lane.b32.xlu0 %v302, 104
    %v1184 = vpop.permute.xlu0 %1183
    %v1186 = vsel %vm315, %v1182, 0
    %v1189 = vsel %vm315, %v1184, 0
    %1191 = vmatprep.subr.bf16.mxu0 0
    %1192 = vmatpush1.bf16.xpose.msra.mxu0 0
    %1193 = vmatprep.subr.bf16.mxu0 0
    %1194 = vmatpush1.bf16.xpose.msra.mxu0 0
    %1195 = vmatprep.subr.bf16.mxu0 0
    %1196 = vmatpush1.bf16.xpose.msra.mxu0 0
    %1197 = vmatprep.subr.bf16.mxu0 0
    %1198 = vmatpush1.bf16.xpose.msra.mxu0 0
    %1199 = vmatprep.subr.bf16.mxu0 0
    %1200 = vmatpush1.bf16.xpose.msra.mxu0 0
    %1201 = vmatprep.subr.bf16.mxu0 0
    %1202 = vmatpush1.bf16.xpose.msra.mxu0 0
    %1203 = vmatprep.subr.bf16.mxu0 0
    %1204 = vmatpush1.bf16.xpose.msra.mxu0 0
    %1205 = vmatprep.subr.bf16.mxu0 0
    %1206 = vmatpush1.bf16.xpose.msra.mxu0 %v1189
    %1207 = vmatprep.subr.bf16.mxu0 0
    %1208 = vmatpush2.bf16.xpose.msra.mxu0 0
    %1209 = vmatprep.subr.bf16.mxu0 0
    %1210 = vmatpush2.bf16.xpose.msra.mxu0 0
    %1211 = vmatprep.subr.bf16.mxu0 0
    %1212 = vmatpush2.bf16.xpose.msra.mxu0 0
    %1213 = vmatprep.subr.bf16.mxu0 0
    %1214 = vmatpush2.bf16.xpose.msra.mxu0 0
    %1215 = vmatprep.subr.bf16.mxu0 0
    %1216 = vmatpush2.bf16.xpose.msra.mxu0 0
    %1217 = vmatprep.subr.bf16.mxu0 0
    %1218 = vmatpush2.bf16.xpose.msra.mxu0 0
    %1219 = vmatprep.subr.bf16.mxu0 0
    %1220 = vmatpush2.bf16.xpose.msra.mxu0 0
    %1221 = vmatprep.subr.bf16.mxu0 0
    %1222 = vmatpush2.bf16.xpose.msra.mxu0 0
    %1223 = vmatprep.mubr.bf16.mxu0 0
    %1224 = vmatmul.mubr.bf16.gmra.mxu0 %v1186
    %v1225 = vpop.f32.mrf.mxu0
    %v1226 = vadd.f32 0.0, %v1225
    %v1227 = vpop.f32.mrf.mxu0
    %v1228 = vpop.f32.mrf.mxu0
    %v1229 = vpop.f32.mrf.mxu0
    %1230 = vdwg.mxu0
    %v1231 = vsel %vm315, %v1176, -inf
    %1232 = vmax.xlane.f32.xlu0 %v1231
    %v1233 = vpop.xlane.xlu0 %1232
    %v1234 = vsel %vm315, %v1226, -inf
    %1235 = vmax.xlane.f32.xlu0 %v1234
    %v1236 = vpop.xlane.xlu0 %1235
    %v1237 = vsub.f32 %v1176, %v1233
    %v1238 = vsub.f32 %v1226, %v1236
    %v1239 = vmul.f32 %v1237, 1.442695
    %v1240 = vpow.pop %v1239
    %v1241 = vmul.f32 %v1238, 1.442695
    %v1242 = vpow.pop %v1241
    %v1243 = vsel %vm315, %v1240, 0.0
    %1244 = vadd.xlane.f32.xlu0 %v1243
    %v1245 = vpop.xlane.xlu0 %1244
    %v1246 = vsel %vm315, %v1242, 0.0
    %1247 = vadd.xlane.f32.xlu0 %v1246
    %v1248 = vpop.xlane.xlu0 %1247
    %v1249 = vrcp.pop %v1245
    %v1250 = vrcp.pop %v1248
    %v1251 = vmul.f32 %v1240, %v1249
    %v1252 = vmul.f32 %v1242, %v1250
    %v1253 = vpack.c.bf16 %v1251, %v1251
    %v1254 = vpack.c.bf16 %v1252, %v1252
    %1255 = vrot.lane.b32.xlu0 %v307, 104
    %v1256 = vpop.permute.xlu0 %1255
    %v1258 = vsel %vm315, %v1253, 0
    %v1261 = vsel %vm435, %v1256, 0
    %1263 = vmatprep.subr.bf16.mxu0 0
    %1264 = vmatpush1.bf16.msra.mxu0 0
    %1265 = vmatprep.subr.bf16.mxu0 0
    %1266 = vmatpush1.bf16.msra.mxu0 0
    %1267 = vmatprep.subr.bf16.mxu0 0
    %1268 = vmatpush1.bf16.msra.mxu0 0
    %1269 = vmatprep.subr.bf16.mxu0 0
    %1270 = vmatpush1.bf16.msra.mxu0 0
    %1271 = vmatprep.subr.bf16.mxu0 0
    %1272 = vmatpush1.bf16.msra.mxu0 0
    %1273 = vmatprep.subr.bf16.mxu0 0
    %1274 = vmatpush1.bf16.msra.mxu0 0
    %1275 = vmatprep.subr.bf16.mxu0 0
    %1276 = vmatpush1.bf16.msra.mxu0 0
    %1277 = vmatprep.subr.bf16.mxu0 0
    %1278 = vmatpush1.bf16.msra.mxu0 %v1261
    %1279 = vmatprep.subr.bf16.mxu0 0
    %1280 = vmatpush2.bf16.msra.mxu0 0
    %1281 = vmatprep.subr.bf16.mxu0 0
    %1282 = vmatpush2.bf16.msra.mxu0 0
    %1283 = vmatprep.subr.bf16.mxu0 0
    %1284 = vmatpush2.bf16.msra.mxu0 0
    %1285 = vmatprep.subr.bf16.mxu0 0
    %1286 = vmatpush2.bf16.msra.mxu0 0
    %1287 = vmatprep.subr.bf16.mxu0 0
    %1288 = vmatpush2.bf16.msra.mxu0 0
    %1289 = vmatprep.subr.bf16.mxu0 0
    %1290 = vmatpush2.bf16.msra.mxu0 0
    %1291 = vmatprep.subr.bf16.mxu0 0
    %1292 = vmatpush2.bf16.msra.mxu0 0
    %1293 = vmatprep.subr.bf16.mxu0 0
    %1294 = vmatpush2.bf16.msra.mxu0 0
    %1295 = vmatprep.mubr.bf16.mxu0 0
    %1296 = vmatmul.mubr.bf16.gmra.mxu0 %v1258
    %v1297 = vpop.f32.mrf.mxu0
    %v1298 = vadd.f32 0.0, %v1297
    %v1299 = vpop.f32.mrf.mxu0
    %v1300 = vpop.f32.mrf.mxu0
    %v1301 = vpop.f32.mrf.mxu0
    %1302 = vdwg.mxu0
    %1303 = vrot.lane.b32.xlu0 %v308, 104
    %v1304 = vpop.permute.xlu0 %1303
    %v1306 = vsel %vm315, %v1254, 0
    %v1309 = vsel %vm435, %v1304, 0
    %1311 = vmatprep.subr.bf16.mxu0 0
    %1312 = vmatpush1.bf16.msra.mxu0 0
    %1313 = vmatprep.subr.bf16.mxu0 0
    %1314 = vmatpush1.bf16.msra.mxu0 0
    %1315 = vmatprep.subr.bf16.mxu0 0
    %1316 = vmatpush1.bf16.msra.mxu0 0
    %1317 = vmatprep.subr.bf16.mxu0 0
    %1318 = vmatpush1.bf16.msra.mxu0 0
    %1319 = vmatprep.subr.bf16.mxu0 0
    %1320 = vmatpush1.bf16.msra.mxu0 0
    %1321 = vmatprep.subr.bf16.mxu0 0
    %1322 = vmatpush1.bf16.msra.mxu0 0
    %1323 = vmatprep.subr.bf16.mxu0 0
    %1324 = vmatpush1.bf16.msra.mxu0 0
    %1325 = vmatprep.subr.bf16.mxu0 0
    %1326 = vmatpush1.bf16.msra.mxu0 %v1309
    %1327 = vmatprep.subr.bf16.mxu0 0
    %1328 = vmatpush2.bf16.msra.mxu0 0
    %1329 = vmatprep.subr.bf16.mxu0 0
    %1330 = vmatpush2.bf16.msra.mxu0 0
    %1331 = vmatprep.subr.bf16.mxu0 0
    %1332 = vmatpush2.bf16.msra.mxu0 0
    %1333 = vmatprep.subr.bf16.mxu0 0
    %1334 = vmatpush2.bf16.msra.mxu0 0
    %1335 = vmatprep.subr.bf16.mxu0 0
    %1336 = vmatpush2.bf16.msra.mxu0 0
    %1337 = vmatprep.subr.bf16.mxu0 0
    %1338 = vmatpush2.bf16.msra.mxu0 0
    %1339 = vmatprep.subr.bf16.mxu0 0
    %1340 = vmatpush2.bf16.msra.mxu0 0
    %1341 = vmatprep.subr.bf16.mxu0 0
    %1342 = vmatpush2.bf16.msra.mxu0 0
    %1343 = vmatprep.mubr.bf16.mxu0 0
    %1344 = vmatmul.mubr.bf16.gmra.mxu0 %v1306
    %v1345 = vpop.f32.mrf.mxu0
    %v1346 = vadd.f32 0.0, %v1345
    %v1347 = vpop.f32.mrf.mxu0
    %v1348 = vpop.f32.mrf.mxu0
    %v1349 = vpop.f32.mrf.mxu0
    %1350 = vdwg.mxu0
    %v1351 = vpack.c.bf16 %v1298, %v1298
    %v1352 = vpack.c.bf16 %v1346, %v1346
    %v1355 = vunpack.c.l.b16 %v1351
    %v1356 = vunpack.c.l.b16 %v1352
    %v1357 = vpack.c.b16 %v1356, %v1355
    %v1359 = vrot.slane %v314, 4
    %v1361 = vsel %vm315, %v1357, 0
    %v1364 = vsel %vm435, %v1359, 0
    %1366 = vmatprep.subr.bf16.mxu0 0
    %1367 = vmatpush1.bf16.msra.mxu0 0
    %1368 = vmatprep.subr.bf16.mxu0 0
    %1369 = vmatpush1.bf16.msra.mxu0 0
    %1370 = vmatprep.subr.bf16.mxu0 0
    %1371 = vmatpush1.bf16.msra.mxu0 0
    %1372 = vmatprep.subr.bf16.mxu0 0
    %1373 = vmatpush1.bf16.msra.mxu0 0
    %1374 = vmatprep.subr.bf16.mxu0 0
    %1375 = vmatpush1.bf16.msra.mxu0 0
    %1376 = vmatprep.subr.bf16.mxu0 0
    %1377 = vmatpush1.bf16.msra.mxu0 0
    %1378 = vmatprep.subr.bf16.mxu0 0
    %1379 = vmatpush1.bf16.msra.mxu0 0
    %1380 = vmatprep.subr.bf16.mxu0 0
    %1381 = vmatpush1.bf16.msra.mxu0 %v1364
    %1382 = vmatprep.subr.bf16.mxu0 0
    %1383 = vmatpush2.bf16.msra.mxu0 0
    %1384 = vmatprep.subr.bf16.mxu0 0
    %1385 = vmatpush2.bf16.msra.mxu0 0
    %1386 = vmatprep.subr.bf16.mxu0 0
    %1387 = vmatpush2.bf16.msra.mxu0 0
    %1388 = vmatprep.subr.bf16.mxu0 0
    %1389 = vmatpush2.bf16.msra.mxu0 0
    %1390 = vmatprep.subr.bf16.mxu0 0
    %1391 = vmatpush2.bf16.msra.mxu0 0
    %1392 = vmatprep.subr.bf16.mxu0 0
    %1393 = vmatpush2.bf16.msra.mxu0 0
    %1394 = vmatprep.subr.bf16.mxu0 0
    %1395 = vmatpush2.bf16.msra.mxu0 0
    %1396 = vmatprep.subr.bf16.mxu0 0
    %1397 = vmatpush2.bf16.msra.mxu0 0
    %1398 = vmatprep.mubr.bf16.mxu0 0
    %1399 = vmatmul.mubr.bf16.gmra.mxu0 %v1361
    %v1400 = vpop.f32.mrf.mxu0
    %v1401 = vadd.f32 0.0, %v1400
    %v1402 = vpop.f32.mrf.mxu0
    %v1403 = vpop.f32.mrf.mxu0
    %v1404 = vadd.f32 0.0, %v1403
    %v1405 = vpop.f32.mrf.mxu0
    %1406 = vdwg.mxu0
    %v1407 = vadd.f32 %v1129, %v1401
    %v1408 = vadd.f32 %v1130, %v1404
    %v1409 = vadd.f32 %v129, %v1407
    %v1410 = vadd.f32 %v130, %v1408
    %v1411 = vsel %vm142, %v1409, 0.0
    %1412 = vadd.xlane.f32.xlu0 %v1411
    %v1413 = vpop.xlane.xlu0 %1412
    %v1414 = vsel %vm142, %v1410, 0.0
    %1415 = vadd.xlane.f32.xlu0 %v1414
    %v1416 = vpop.xlane.xlu0 %1415
    %v1417 = vrcp.pop 32.0
    %v1418 = vmul.f32 %v1413, %v1417
    %v1419 = vmul.f32 %v1416, %v1417
    %v1420 = vsub.f32 %v1409, %v1418
    %v1421 = vsub.f32 %v1410, %v1419
    %v1422 = vmul.f32 %v1420, %v1420
    %v1423 = vmul.f32 %v1421, %v1421
    %v1424 = vsel %vm142, %v1422, 0.0
    %1425 = vadd.xlane.f32.xlu0 %v1424
    %v1426 = vpop.xlane.xlu0 %1425
    %v1427 = vsel %vm142, %v1423, 0.0
    %1428 = vadd.xlane.f32.xlu0 %v1427
    %v1429 = vpop.xlane.xlu0 %1428
    %v1430 = vmul.f32 %v1426, %v1417
    %v1431 = vmul.f32 %v1429, %v1417
    %v1432 = vadd.f32 %v1430, 1e-06
    %v1433 = vadd.f32 %v1431, 1e-06
    %v1434 = vrsqrt.pop %v1432
    %v1435 = vrsqrt.pop %v1433
    %v1436 = vmul.f32 %v1420, %v1434
    %v1437 = vmul.f32 %v1421, %v1435
    %v1438 = vld [vmem:[%s7] sm:$0x1]
    %v1440 = vlaneseq
    %v1441 = vshrl.u32 %v1440, 7
    %v1442 = vsub.s32 0, %v1441
    %v1443 = vrot.slane %v1438, %v1442
    %v1445 = vmul.f32 %v1436, %v1443
    %v1446 = vmul.f32 %v1437, %v1443
    %v1447 = vld [vmem:[%s8] sm:$0x1]
    %v1449 = vlaneseq
    %v1450 = vshrl.u32 %v1449, 7
    %v1451 = vsub.s32 0, %v1450
    %v1452 = vrot.slane %v1447, %v1451
    %v1454 = vadd.f32 %v1445, %v1452
    %v1455 = vadd.f32 %v1446, %v1452
    %1456 = vst.msk [vmem:[#allocation14] sm:$0xff] %vm142, %v1454
    %1457 = vst.msk [vmem:[#allocation14 + $0x8] sm:$0xff] %vm142, %v1455
    // Predicated region
    $region66: #{tpu_custom_call.1} parent=1 // pred_check
      _
    $region67: #{tpu_custom_call.1} parent=1 // pred_check_branch
      %1459 = sbr.rel (0) target = $region69
    $region68: #{tpu_custom_call.1} parent=1 // pred_region
      %s1461 = ssub.s32 256, 256
      %1462 = vsyncadd [#allocation4], %s1461
      %s1463 = sshll.u32 [#allocation14], 4
      %s1464 = int_to_ptr.vmem [resolvable:$true] %s1463
      %1469 = dma.vmem_to_hbm [thread:$0]  %s1464, 256, %s9, [#allocation4], 128, 128, 8
    $region69: #{tpu_custom_call.1} parent=1 // pred_fallthru
      _
    // Predicated region
    $region70: #{tpu_custom_call.1} parent=1 // pred_check
      _
    $region71: #{tpu_custom_call.1} parent=1 // pred_check_branch
      %1471 = sbr.rel (0) target = $region73
    $region72: #{tpu_custom_call.1} parent=1 // pred_region
      %1472 = dma.done [#allocation4], 256
    $region73: #{tpu_custom_call.1} parent=1 // pred_fallthru
      _
    %1473 = vsyncpa [#allocation3], 1
    %1474 = vsyncpa [#allocation6], 1
    %1475 = vsyncpa [#allocation9], 1
    %1476 = vsyncpa [#allocation12], 1
    %1477 = vsyncpa [#allocation4], 1

</llo_original>
